<compile_context>
chip_gen: v7x
topology: tpu7x:2x2x1
jax: 0.10.0
libtpu: 0.0.40
codegen_flags: <defaults>
</compile_context>

<pallas_src>
import functools
import math

import jax
import jax.numpy as jnp
from jax import lax
from jax.experimental import pallas as pl
from jax.experimental.pallas import tpu as pltpu

_LANE = 128
_ROW_ALIGN = 256


def _round_up(n, m):
    return ((n + m - 1) // m) * m


def _cve_kernel(max_value, eps, d_real, d_pad,
                x_ref, w1_ref, b1_ref, w2_ref, b2_ref, g_ref, beta_ref,
                o_ref):
    # x_ref: (TN, 1) f32 ; w1/b1/b2/gamma/beta: (1, Dp) f32 ; w2: (Dp, Dp) mm dtype
    # o_ref: (TN, Dp)
    x = jnp.minimum(x_ref[...], max_value)                   # torch.clamp(max=max_value)

    # linear1 (1 -> D) is a broadcast multiply-add; keep it on the VPU.
    h = jnp.maximum(x * w1_ref[...] + b1_ref[...], 0.0)      # (TN, Dp), ReLU

    # linear2 (D -> D) on the MXU; bf16 inputs (default) with f32 accumulation.
    y = jnp.dot(h.astype(w2_ref.dtype), w2_ref[...],
                preferred_element_type=jnp.float32)
    y = y + b2_ref[...]                                      # pad lanes (if any) stay 0

    # LayerNorm over the real D lanes, two-pass (mean, then centered variance).
    inv_d = 1.0 / d_real
    mean = jnp.sum(y, axis=-1, keepdims=True) * inv_d        # pad lanes of y are 0
    centered = y - mean
    if d_pad != d_real:
        # Pad lanes of `centered` are -mean; mask them so the variance (and the
        # padded output lanes) stay correct.  Only emitted when D % 128 != 0.
        lane = lax.broadcasted_iota(jnp.int32, centered.shape, 1)
        centered = jnp.where(lane < d_real, centered, 0.0)
    var = jnp.sum(centered * centered, axis=-1, keepdims=True) * inv_d
    normed = centered * lax.rsqrt(var + eps)
    o_ref[...] = (normed * g_ref[...] + beta_ref[...]).astype(o_ref.dtype)

    # Dropout: identity (eval mode).


def continuous_value_encoder(x, params, *, max_value=10, eps=1e-5,
                             matmul_dtype=jnp.bfloat16,
                             out_dtype=jnp.bfloat16,
                             block_n=2048,
                             vmem_limit_bytes=None,
                             single_buffer_params=True):
    """x: (B, S) float -> (B, S, D) out_dtype.

    block_n: row-tile size.  Default 2048 amortizes the ~0.35 us per-grid-step
    overhead; v5e/v6e (128 MiB VMEM) can raise it to 4096 (vmem_limit_bytes is
    derived automatically), keep <= 2048 on v7x (64 MiB physical VMEM).
    matmul_dtype: bf16 (default, MXU-native on all three chips; do NOT use f32
    on v5e for perf runs) or f32 for strict parity.
    out_dtype: bf16 (default, halves HBM writeback on this writeback-bound
    kernel) or f32.  The kernel is tuned for d_model % 128 == 0 (lane-dense
    output, free reshape); other d_model pays lane padding + a [:, :D] slice.
    """
    B, S = x.shape
    D = params["w2"].shape[0]
    N = B * S

    D_pad = _round_up(D, _LANE)                       # == D when D % 128 == 0

    # Row tile: multiple of 256 (MXU-friendly), no row padding (Pallas masks the
    # ragged last tile).  When the problem fits one tile, split it so v7x's
    # second TensorCore gets work.
    TN = min(block_n, _round_up(N, _ROW_ALIGN))
    if N <= block_n and N > _ROW_ALIGN:
        TN = min(TN, _round_up(pl.cdiv(N, 2), _ROW_ALIGN))
    grid_n = pl.cdiv(N, TN)

    x2d = x.reshape(N, 1).astype(jnp.float32)

    def pad_lanes(p):                                 # (1, D) -> (1, D_pad), zero pad
        p = p.astype(jnp.float32).reshape(1, D)
        return jnp.pad(p, ((0, 0), (0, D_pad - D))) if D_pad != D else p

    w1 = pad_lanes(params["w1"])
    b1 = pad_lanes(params["b1"])
    b2 = pad_lanes(params["b2"])
    gamma = pad_lanes(params["gamma"])
    beta = pad_lanes(params["beta"])
    w2 = params["w2"].astype(matmul_dtype)            # bf16 halves DMA + resident VMEM
    if D_pad != D:
        w2 = jnp.pad(w2, ((0, D_pad - D), (0, D_pad - D)))

    mm_bytes = jnp.dtype(matmul_dtype).itemsize
    out_bytes = jnp.dtype(out_dtype).itemsize

    if vmem_limit_bytes is None:
        # Explicit budget (v5e default scoped VMEM is only 16 MiB).  Includes the
        # hidden lane padding of the (TN, 1) x block to (TN, 128) in VMEM.
        out_buf = TN * D_pad * out_bytes
        x_buf = TN * _LANE * 4
        w2_buf = D_pad * D_pad * mm_bytes
        temps = TN * D_pad * (3 * 4 + mm_bytes)       # h, y, normed (f32) + bf16 cast
        vmem_limit_bytes = min(2 * (out_buf + x_buf) + 2 * w2_buf + temps + (4 << 20),
                               100 << 20)

    kernel = functools.partial(_cve_kernel, float(max_value), float(eps), D, D_pad)

    cost = pl.CostEstimate(
        flops=2 * N * D_pad * D_pad + 8 * N * D_pad,
        transcendentals=N,
        bytes_accessed=(4 * N                                   # x
                        + D_pad * D_pad * mm_bytes              # w2
                        + 5 * 4 * D_pad                         # small params
                        + N * D_pad * out_bytes),               # output
    )

    compiler_params = pltpu.CompilerParams(
        dimension_semantics=("parallel",),            # shard row tiles across TCs on v7x
        vmem_limit_bytes=int(vmem_limit_bytes),
    )

    def build(param_pipeline_mode):
        extra = {} if param_pipeline_mode is None else {"pipeline_mode": param_pipeline_mode}
        const = lambda i: (0, 0)                      # resident params: DMA'd once
        return pl.pallas_call(
            kernel,
            out_shape=jax.ShapeDtypeStruct((N, D_pad), out_dtype),
            grid_spec=pltpu.PrefetchScalarGridSpec(
                num_scalar_prefetch=0,
                grid=(grid_n,),
                in_specs=[
                    pl.BlockSpec((TN, 1), lambda i: (i, 0)),        # x rows (pipelined)
                    pl.BlockSpec((1, D_pad), const, **extra),       # w1
                    pl.BlockSpec((1, D_pad), const, **extra),       # b1
                    pl.BlockSpec((D_pad, D_pad), const, **extra),   # w2 (resident)
                    pl.BlockSpec((1, D_pad), const, **extra),       # b2
                    pl.BlockSpec((1, D_pad), const, **extra),       # ln gamma
                    pl.BlockSpec((1, D_pad), const, **extra),       # ln beta
                ],
                out_specs=pl.BlockSpec((TN, D_pad), lambda i: (i, 0)),
            ),
            compiler_params=compiler_params,
            cost_estimate=cost,
        )

    args = (x2d, w1, b1, w2, b2, gamma, beta)
    if single_buffer_params:
        try:
            out = build(pl.Buffered(1))(*args)        # single-buffer constant params
        except Exception:
            out = build(None)(*args)                  # fallback: default buffering
    else:
        out = build(None)(*args)

    if D_pad != D:                                    # only when D % 128 != 0
        out = out[:, :D]
    return out.reshape(B, S, D)                       # free view when D % 128 == 0


def init_params(key, d_model):
    """Deterministic init mirroring nn.Linear / nn.LayerNorm shapes.
    linear1: weight (d_model, 1), bias (d_model,)  -> stored as (1, D), (1, D)
    linear2: weight (d_model, d_model), bias (d_model,) -> stored as (in, out), (1, D)
    norm:    gamma/beta (d_model,) -> (1, D)
    """
    k1, k2, k3, k4 = jax.random.split(key, 4)
    bound1 = 1.0                                   # nn.Linear(1, D): fan_in = 1
    w1 = jax.random.uniform(k1, (1, d_model), jnp.float32, -bound1, bound1)
    b1 = jax.random.uniform(k2, (1, d_model), jnp.float32, -bound1, bound1)
    bound2 = 1.0 / math.sqrt(d_model)              # nn.Linear(D, D)
    w2 = jax.random.uniform(k3, (d_model, d_model), jnp.float32, -bound2, bound2)
    b2 = jax.random.uniform(k4, (1, d_model), jnp.float32, -bound2, bound2)
    gamma = jnp.ones((1, d_model), jnp.float32)
    beta = jnp.zeros((1, d_model), jnp.float32)
    return {"w1": w1, "b1": b1, "w2": w2, "b2": b2, "gamma": gamma, "beta": beta}


def _reference(x, params, max_value=10, eps=1e-5):
    x = x[..., None]
    x = jnp.minimum(x, float(max_value))
    h = jnp.maximum(x * params["w1"][0] + params["b1"][0], 0.0)
    y = h @ params["w2"] + params["b2"][0]
    mean = jnp.mean(y, -1, keepdims=True)
    var = jnp.mean((y - mean) ** 2, -1, keepdims=True)
    return (y - mean) / jnp.sqrt(var + eps) * params["gamma"][0] + params["beta"][0]


if __name__ == "__main__":
    key = jax.random.PRNGKey(0)

    # --- Check 1: small module-like shapes (B=2, S=8, d_model=32). -----------
    B, S, D = 2, 8, 32
    kx, kp, kx2, kp2 = jax.random.split(key, 4)
    x = jax.random.uniform(kx, (B, S), jnp.float32, 0.0, 20.0)  # some values > max_value
    params = init_params(kp, D)
    ref = _reference(x, params, max_value=10)

    # Strict-precision path (f32 MXU passes, f32 out): tight parity.
    out_f32 = continuous_value_encoder(x, params, max_value=10,
                                       matmul_dtype=jnp.float32,
                                       out_dtype=jnp.float32)
    out_f32 = jax.block_until_ready(out_f32)
    assert out_f32.shape == (B, S, D)
    assert jnp.allclose(out_f32, ref, atol=1e-4, rtol=1e-4), "f32 path mismatch vs reference"

    # Default fast path: bf16 MXU inputs + bf16 output (looser tolerance).
    out_fast = continuous_value_encoder(x, params, max_value=10)
    out_fast = jax.block_until_ready(out_fast)
    assert out_fast.shape == (B, S, D)
    assert jnp.allclose(out_fast.astype(jnp.float32), ref, atol=5e-2, rtol=5e-2), \
        "fast path mismatch vs reference"

    # --- Check 2: lane-dense D (multiple of 128) with a ragged last row tile --
    B2, S2, D2 = 2, 150, 128                       # N=300 -> 2 row tiles, last one partial
    x2 = jax.random.uniform(kx2, (B2, S2), jnp.float32, 0.0, 20.0)
    params2 = init_params(kp2, D2)
    ref2 = _reference(x2, params2, max_value=10)
    out2 = continuous_value_encoder(x2, params2, max_value=10,
                                    matmul_dtype=jnp.float32,
                                    out_dtype=jnp.float32)
    out2 = jax.block_until_ready(out2)
    assert out2.shape == (B2, S2, D2)
    assert jnp.allclose(out2, ref2, atol=1e-3, rtol=1e-3), "ragged-tile path mismatch"

    print("KERNEL_OK")
</pallas_src>

<mosaic_0001>
module attributes {stable_mosaic.version = 11 : i64} {
  func.func @_cve_kernel(%arg0: i32, %arg1: memref<256x1xf32, #tpu.memory_space<vmem>>, %arg2: memref<1x128xf32, #tpu.memory_space<vmem>>, %arg3: memref<1x128xf32, #tpu.memory_space<vmem>>, %arg4: memref<128x128xf32, #tpu.memory_space<vmem>>, %arg5: memref<1x128xf32, #tpu.memory_space<vmem>>, %arg6: memref<1x128xf32, #tpu.memory_space<vmem>>, %arg7: memref<1x128xf32, #tpu.memory_space<vmem>>, %arg8: memref<256x128xf32, #tpu.memory_space<vmem>>) attributes {dimension_semantics = [#tpu.dimension_semantics<parallel>], iteration_bounds = array<i64: 1>, scalar_prefetch = 0 : i64, scratch_operands = 0 : i64, tpu.core_type = #tpu.core_type<tc>, window_params = [{transform_indices = @transform_0, window_bounds = array<i64: 256, 1>}, {pipeline_mode = #tpu.pipeline_mode<synchronous>, transform_indices = @transform_1, window_bounds = array<i64: 1, 128>}, {pipeline_mode = #tpu.pipeline_mode<synchronous>, transform_indices = @transform_2, window_bounds = array<i64: 1, 128>}, {pipeline_mode = #tpu.pipeline_mode<synchronous>, transform_indices = @transform_3, window_bounds = array<i64: 128, 128>}, {pipeline_mode = #tpu.pipeline_mode<synchronous>, transform_indices = @transform_4, window_bounds = array<i64: 1, 128>}, {pipeline_mode = #tpu.pipeline_mode<synchronous>, transform_indices = @transform_5, window_bounds = array<i64: 1, 128>}, {pipeline_mode = #tpu.pipeline_mode<synchronous>, transform_indices = @transform_6, window_bounds = array<i64: 1, 128>}, {transform_indices = @transform_7, window_bounds = array<i64: 256, 128>}]} {
    %c0 = arith.constant 0 : index
    %c0_0 = arith.constant 0 : index
    %0 = vector.load %arg1[%c0, %c0_0] : memref<256x1xf32, #tpu.memory_space<vmem>>, vector<256x1xf32>
    %cst = arith.constant 1.000000e+01 : f32
    %1 = vector.broadcast %cst : f32 to vector<256x1xf32>
    %2 = arith.minimumf %0, %1 : vector<256x1xf32>
    %c0_1 = arith.constant 0 : index
    %c0_2 = arith.constant 0 : index
    %3 = vector.load %arg2[%c0_1, %c0_2] : memref<1x128xf32, #tpu.memory_space<vmem>>, vector<1x128xf32>
    %4 = vector.broadcast %2 : vector<256x1xf32> to vector<256x128xf32>
    %5 = vector.broadcast %3 : vector<1x128xf32> to vector<256x128xf32>
    %6 = arith.mulf %4, %5 : vector<256x128xf32>
    %c0_3 = arith.constant 0 : index
    %c0_4 = arith.constant 0 : index
    %7 = vector.load %arg3[%c0_3, %c0_4] : memref<1x128xf32, #tpu.memory_space<vmem>>, vector<1x128xf32>
    %8 = vector.broadcast %7 : vector<1x128xf32> to vector<256x128xf32>
    %9 = arith.addf %6, %8 : vector<256x128xf32>
    %cst_5 = arith.constant 0.000000e+00 : f32
    %10 = vector.broadcast %cst_5 : f32 to vector<256x128xf32>
    %11 = arith.maximumf %9, %10 : vector<256x128xf32>
    %c0_6 = arith.constant 0 : index
    %c0_7 = arith.constant 0 : index
    %12 = vector.load %arg4[%c0_6, %c0_7] : memref<128x128xf32, #tpu.memory_space<vmem>>, vector<128x128xf32>
    %cst_8 = arith.constant dense<0.000000e+00> : vector<256x128xf32>
    %13 = tpu.matmul %11, %12, %cst_8 {dimension_numbers = #tpu.dot_dimension_numbers<[1], [0], [0], [1], [0, 0, 1, 1], [], []>} : vector<256x128xf32>, vector<128x128xf32>, vector<256x128xf32> -> vector<256x128xf32>
    %c0_9 = arith.constant 0 : index
    %c0_10 = arith.constant 0 : index
    %14 = vector.load %arg5[%c0_9, %c0_10] : memref<1x128xf32, #tpu.memory_space<vmem>>, vector<1x128xf32>
    %15 = vector.broadcast %14 : vector<1x128xf32> to vector<256x128xf32>
    %16 = arith.addf %13, %15 : vector<256x128xf32>
    %cst_11 = arith.constant dense<0.000000e+00> : vector<256xf32>
    %17 = vector.multi_reduction <add>, %16, %cst_11 [1] : vector<256x128xf32> to vector<256xf32>
    %18 = vector.shape_cast %17 : vector<256xf32> to vector<256x1xf32>
    %cst_12 = arith.constant 3.125000e-02 : f32
    %19 = vector.broadcast %cst_12 : f32 to vector<256x1xf32>
    %20 = arith.mulf %18, %19 : vector<256x1xf32>
    %21 = vector.broadcast %20 : vector<256x1xf32> to vector<256x128xf32>
    %22 = arith.subf %16, %21 : vector<256x128xf32>
    %23 = tpu.iota {dimensions = array<i32: 1>} : vector<256x128xi32>
    %c32_i32 = arith.constant 32 : i32
    %24 = vector.broadcast %c32_i32 : i32 to vector<256x128xi32>
    %25 = arith.cmpi slt, %23, %24 : vector<256x128xi32>
    %cst_13 = arith.constant 0.000000e+00 : f32
    %26 = vector.broadcast %cst_13 : f32 to vector<256x128xf32>
    %27 = arith.select %25, %22, %26 : vector<256x128xi1>, vector<256x128xf32>
    %28 = arith.mulf %27, %27 : vector<256x128xf32>
    %cst_14 = arith.constant dense<0.000000e+00> : vector<256xf32>
    %29 = vector.multi_reduction <add>, %28, %cst_14 [1] : vector<256x128xf32> to vector<256xf32>
    %30 = vector.shape_cast %29 : vector<256xf32> to vector<256x1xf32>
    %cst_15 = arith.constant 3.125000e-02 : f32
    %31 = vector.broadcast %cst_15 : f32 to vector<256x1xf32>
    %32 = arith.mulf %30, %31 : vector<256x1xf32>
    %cst_16 = arith.constant 9.99999974E-6 : f32
    %33 = vector.broadcast %cst_16 : f32 to vector<256x1xf32>
    %34 = arith.addf %32, %33 : vector<256x1xf32>
    %35 = math.rsqrt %34 : vector<256x1xf32>
    %36 = vector.broadcast %35 : vector<256x1xf32> to vector<256x128xf32>
    %37 = arith.mulf %27, %36 : vector<256x128xf32>
    %c0_17 = arith.constant 0 : index
    %c0_18 = arith.constant 0 : index
    %38 = vector.load %arg6[%c0_17, %c0_18] : memref<1x128xf32, #tpu.memory_space<vmem>>, vector<1x128xf32>
    %39 = vector.broadcast %38 : vector<1x128xf32> to vector<256x128xf32>
    %40 = arith.mulf %37, %39 : vector<256x128xf32>
    %c0_19 = arith.constant 0 : index
    %c0_20 = arith.constant 0 : index
    %41 = vector.load %arg7[%c0_19, %c0_20] : memref<1x128xf32, #tpu.memory_space<vmem>>, vector<1x128xf32>
    %42 = vector.broadcast %41 : vector<1x128xf32> to vector<256x128xf32>
    %43 = arith.addf %40, %42 : vector<256x128xf32>
    %c0_21 = arith.constant 0 : index
    %c0_22 = arith.constant 0 : index
    %44 = vector.load %arg8[%c0_21, %c0_22] : memref<256x128xf32, #tpu.memory_space<vmem>>, vector<256x128xf32>
    tpu.vector_store %arg8[%c0_21, %c0_22], %43 {strides = array<i32>} : memref<256x128xf32, #tpu.memory_space<vmem>>, vector<256x128xf32>,
    return
  }
  func.func @transform_0(%arg0: i32) -> (i32, i32) {
    %c0_i32 = arith.constant 0 : i32
    %c0_i32_0 = arith.constant 0 : i32
    return %arg0, %c0_i32 : i32, i32
  }
  func.func @transform_1(%arg0: i32) -> (i32, i32) {
    %c0_i32 = arith.constant 0 : i32
    %c0_i32_0 = arith.constant 0 : i32
    %c0_i32_1 = arith.constant 0 : i32
    return %c0_i32, %c0_i32_0 : i32, i32
  }
  func.func @transform_2(%arg0: i32) -> (i32, i32) {
    %c0_i32 = arith.constant 0 : i32
    %c0_i32_0 = arith.constant 0 : i32
    %c0_i32_1 = arith.constant 0 : i32
    return %c0_i32, %c0_i32_0 : i32, i32
  }
  func.func @transform_3(%arg0: i32) -> (i32, i32) {
    %c0_i32 = arith.constant 0 : i32
    %c0_i32_0 = arith.constant 0 : i32
    %c0_i32_1 = arith.constant 0 : i32
    return %c0_i32, %c0_i32_0 : i32, i32
  }
  func.func @transform_4(%arg0: i32) -> (i32, i32) {
    %c0_i32 = arith.constant 0 : i32
    %c0_i32_0 = arith.constant 0 : i32
    %c0_i32_1 = arith.constant 0 : i32
    return %c0_i32, %c0_i32_0 : i32, i32
  }
  func.func @transform_5(%arg0: i32) -> (i32, i32) {
    %c0_i32 = arith.constant 0 : i32
    %c0_i32_0 = arith.constant 0 : i32
    %c0_i32_1 = arith.constant 0 : i32
    return %c0_i32, %c0_i32_0 : i32, i32
  }
  func.func @transform_6(%arg0: i32) -> (i32, i32) {
    %c0_i32 = arith.constant 0 : i32
    %c0_i32_0 = arith.constant 0 : i32
    %c0_i32_1 = arith.constant 0 : i32
    return %c0_i32, %c0_i32_0 : i32, i32
  }
  func.func @transform_7(%arg0: i32) -> (i32, i32) {
    %c0_i32 = arith.constant 0 : i32
    %c0_i32_0 = arith.constant 0 : i32
    return %arg0, %c0_i32 : i32, i32
  }
}

module attributes {stable_mosaic.version = 11 : i64} {
  func.func @_cve_kernel(%arg0: i32, %arg1: memref<256x1xf32, #tpu.memory_space<vmem>>, %arg2: memref<1x128xf32, #tpu.memory_space<vmem>>, %arg3: memref<1x128xf32, #tpu.memory_space<vmem>>, %arg4: memref<128x128xf32, #tpu.memory_space<vmem>>, %arg5: memref<1x128xf32, #tpu.memory_space<vmem>>, %arg6: memref<1x128xf32, #tpu.memory_space<vmem>>, %arg7: memref<1x128xf32, #tpu.memory_space<vmem>>, %arg8: memref<256x128xf32, #tpu.memory_space<vmem>>) attributes {dimension_semantics = [#tpu.dimension_semantics<parallel>], iteration_bounds = array<i64: 1>, scalar_prefetch = 0 : i64, scratch_operands = 0 : i64, tpu.core_type = #tpu.core_type<tc>, window_params = [{transform_indices = @transform_0, window_bounds = array<i64: 256, 1>}, {pipeline_mode = #tpu.pipeline_mode<synchronous>, transform_indices = @transform_1, window_bounds = array<i64: 1, 128>}, {pipeline_mode = #tpu.pipeline_mode<synchronous>, transform_indices = @transform_2, window_bounds = array<i64: 1, 128>}, {pipeline_mode = #tpu.pipeline_mode<synchronous>, transform_indices = @transform_3, window_bounds = array<i64: 128, 128>}, {pipeline_mode = #tpu.pipeline_mode<synchronous>, transform_indices = @transform_4, window_bounds = array<i64: 1, 128>}, {pipeline_mode = #tpu.pipeline_mode<synchronous>, transform_indices = @transform_5, window_bounds = array<i64: 1, 128>}, {pipeline_mode = #tpu.pipeline_mode<synchronous>, transform_indices = @transform_6, window_bounds = array<i64: 1, 128>}, {transform_indices = @transform_7, window_bounds = array<i64: 256, 128>}]} {
    %c0 = arith.constant 0 : index
    %c0_0 = arith.constant 0 : index
    %0 = vector.load %arg1[%c0, %c0_0] : memref<256x1xf32, #tpu.memory_space<vmem>>, vector<256x1xf32>
    %cst = arith.constant 1.000000e+01 : f32
    %1 = vector.broadcast %cst : f32 to vector<256x1xf32>
    %2 = arith.minimumf %0, %1 : vector<256x1xf32>
    %c0_1 = arith.constant 0 : index
    %c0_2 = arith.constant 0 : index
    %3 = vector.load %arg2[%c0_1, %c0_2] : memref<1x128xf32, #tpu.memory_space<vmem>>, vector<1x128xf32>
    %4 = vector.broadcast %2 : vector<256x1xf32> to vector<256x128xf32>
    %5 = vector.broadcast %3 : vector<1x128xf32> to vector<256x128xf32>
    %6 = arith.mulf %4, %5 : vector<256x128xf32>
    %c0_3 = arith.constant 0 : index
    %c0_4 = arith.constant 0 : index
    %7 = vector.load %arg3[%c0_3, %c0_4] : memref<1x128xf32, #tpu.memory_space<vmem>>, vector<1x128xf32>
    %8 = vector.broadcast %7 : vector<1x128xf32> to vector<256x128xf32>
    %9 = arith.addf %6, %8 : vector<256x128xf32>
    %cst_5 = arith.constant 0.000000e+00 : f32
    %10 = vector.broadcast %cst_5 : f32 to vector<256x128xf32>
    %11 = arith.maximumf %9, %10 : vector<256x128xf32>
    %c0_6 = arith.constant 0 : index
    %c0_7 = arith.constant 0 : index
    %12 = vector.load %arg4[%c0_6, %c0_7] : memref<128x128xf32, #tpu.memory_space<vmem>>, vector<128x128xf32>
    %cst_8 = arith.constant dense<0.000000e+00> : vector<256x128xf32>
    %13 = tpu.matmul %11, %12, %cst_8 {dimension_numbers = #tpu.dot_dimension_numbers<[1], [0], [0], [1], [0, 0, 1, 1], [], []>} : vector<256x128xf32>, vector<128x128xf32>, vector<256x128xf32> -> vector<256x128xf32>
    %c0_9 = arith.constant 0 : index
    %c0_10 = arith.constant 0 : index
    %14 = vector.load %arg5[%c0_9, %c0_10] : memref<1x128xf32, #tpu.memory_space<vmem>>, vector<1x128xf32>
    %15 = vector.broadcast %14 : vector<1x128xf32> to vector<256x128xf32>
    %16 = arith.addf %13, %15 : vector<256x128xf32>
    %cst_11 = arith.constant dense<0.000000e+00> : vector<256xf32>
    %17 = vector.multi_reduction <add>, %16, %cst_11 [1] : vector<256x128xf32> to vector<256xf32>
    %18 = vector.shape_cast %17 : vector<256xf32> to vector<256x1xf32>
    %cst_12 = arith.constant 3.125000e-02 : f32
    %19 = vector.broadcast %cst_12 : f32 to vector<256x1xf32>
    %20 = arith.mulf %18, %19 : vector<256x1xf32>
    %21 = vector.broadcast %20 : vector<256x1xf32> to vector<256x128xf32>
    %22 = arith.subf %16, %21 : vector<256x128xf32>
    %23 = tpu.iota {dimensions = array<i32: 1>} : vector<256x128xi32>
    %c32_i32 = arith.constant 32 : i32
    %24 = vector.broadcast %c32_i32 : i32 to vector<256x128xi32>
    %25 = arith.cmpi slt, %23, %24 : vector<256x128xi32>
    %cst_13 = arith.constant 0.000000e+00 : f32
    %26 = vector.broadcast %cst_13 : f32 to vector<256x128xf32>
    %27 = arith.select %25, %22, %26 : vector<256x128xi1>, vector<256x128xf32>
    %28 = arith.mulf %27, %27 : vector<256x128xf32>
    %cst_14 = arith.constant dense<0.000000e+00> : vector<256xf32>
    %29 = vector.multi_reduction <add>, %28, %cst_14 [1] : vector<256x128xf32> to vector<256xf32>
    %30 = vector.shape_cast %29 : vector<256xf32> to vector<256x1xf32>
    %cst_15 = arith.constant 3.125000e-02 : f32
    %31 = vector.broadcast %cst_15 : f32 to vector<256x1xf32>
    %32 = arith.mulf %30, %31 : vector<256x1xf32>
    %cst_16 = arith.constant 9.99999974E-6 : f32
    %33 = vector.broadcast %cst_16 : f32 to vector<256x1xf32>
    %34 = arith.addf %32, %33 : vector<256x1xf32>
    %35 = math.rsqrt %34 : vector<256x1xf32>
    %36 = vector.broadcast %35 : vector<256x1xf32> to vector<256x128xf32>
    %37 = arith.mulf %27, %36 : vector<256x128xf32>
    %c0_17 = arith.constant 0 : index
    %c0_18 = arith.constant 0 : index
    %38 = vector.load %arg6[%c0_17, %c0_18] : memref<1x128xf32, #tpu.memory_space<vmem>>, vector<1x128xf32>
    %39 = vector.broadcast %38 : vector<1x128xf32> to vector<256x128xf32>
    %40 = arith.mulf %37, %39 : vector<256x128xf32>
    %c0_19 = arith.constant 0 : index
    %c0_20 = arith.constant 0 : index
    %41 = vector.load %arg7[%c0_19, %c0_20] : memref<1x128xf32, #tpu.memory_space<vmem>>, vector<1x128xf32>
    %42 = vector.broadcast %41 : vector<1x128xf32> to vector<256x128xf32>
    %43 = arith.addf %40, %42 : vector<256x128xf32>
    %c0_21 = arith.constant 0 : index
    %c0_22 = arith.constant 0 : index
    %44 = vector.load %arg8[%c0_21, %c0_22] : memref<256x128xf32, #tpu.memory_space<vmem>>, vector<256x128xf32>
    tpu.vector_store %arg8[%c0_21, %c0_22], %43 {strides = array<i32>} : memref<256x128xf32, #tpu.memory_space<vmem>>, vector<256x128xf32>,
    return
  }
  func.func @transform_0(%arg0: i32) -> (i32, i32) {
    %c0_i32 = arith.constant 0 : i32
    %c0_i32_0 = arith.constant 0 : i32
    return %arg0, %c0_i32 : i32, i32
  }
  func.func @transform_1(%arg0: i32) -> (i32, i32) {
    %c0_i32 = arith.constant 0 : i32
    %c0_i32_0 = arith.constant 0 : i32
    %c0_i32_1 = arith.constant 0 : i32
    return %c0_i32, %c0_i32_0 : i32, i32
  }
  func.func @transform_2(%arg0: i32) -> (i32, i32) {
    %c0_i32 = arith.constant 0 : i32
    %c0_i32_0 = arith.constant 0 : i32
    %c0_i32_1 = arith.constant 0 : i32
    return %c0_i32, %c0_i32_0 : i32, i32
  }
  func.func @transform_3(%arg0: i32) -> (i32, i32) {
    %c0_i32 = arith.constant 0 : i32
    %c0_i32_0 = arith.constant 0 : i32
    %c0_i32_1 = arith.constant 0 : i32
    return %c0_i32, %c0_i32_0 : i32, i32
  }
  func.func @transform_4(%arg0: i32) -> (i32, i32) {
    %c0_i32 = arith.constant 0 : i32
    %c0_i32_0 = arith.constant 0 : i32
    %c0_i32_1 = arith.constant 0 : i32
    return %c0_i32, %c0_i32_0 : i32, i32
  }
  func.func @transform_5(%arg0: i32) -> (i32, i32) {
    %c0_i32 = arith.constant 0 : i32
    %c0_i32_0 = arith.constant 0 : i32
    %c0_i32_1 = arith.constant 0 : i32
    return %c0_i32, %c0_i32_0 : i32, i32
  }
  func.func @transform_6(%arg0: i32) -> (i32, i32) {
    %c0_i32 = arith.constant 0 : i32
    %c0_i32_0 = arith.constant 0 : i32
    %c0_i32_1 = arith.constant 0 : i32
    return %c0_i32, %c0_i32_0 : i32, i32
  }
  func.func @transform_7(%arg0: i32) -> (i32, i32) {
    %c0_i32 = arith.constant 0 : i32
    %c0_i32_0 = arith.constant 0 : i32
    return %arg0, %c0_i32 : i32, i32
  }
}

</mosaic_0001>

<llo_original>
// kernel: tpu_custom_call.1
$region0: #{tpu_custom_call.1}
  #allocation0 [shape = 'u32[]', space=smem, size = 0x4, offset = 0x4, fixed_abs, tag = 'smem constant byte address 0x4 - core index']
  #allocation1 [shape = 'u32[144,128]{1,0:T(1,128)}', space=vmem, size = 0x12000, scoped, tag = 'internal scratch']
  %s0 = inlined_call_operand.vmem [shape: f32[16,1], index: 0, kind: input, shape index: {}]
  %s1 = inlined_call_operand.vmem [shape: f32[1,128], index: 1, kind: input, shape index: {}]
  %s2 = inlined_call_operand.vmem [shape: f32[1,128], index: 2, kind: input, shape index: {}]
  %s3 = inlined_call_operand.hbm [shape: f32[128,128], index: 3, kind: input, shape index: {}]
  %s4 = inlined_call_operand.vmem [shape: f32[1,128], index: 4, kind: input, shape index: {}]
  %s5 = inlined_call_operand.vmem [shape: f32[1,128], index: 5, kind: input, shape index: {}]
  %s6 = inlined_call_operand.vmem [shape: f32[1,128], index: 6, kind: input, shape index: {}]
  %s7 = inlined_call_operand.hbm [shape: f32[16,128], index: 7, kind: output, shape index: {}]
  %s8 = sld [smem:[#allocation0]]
  $region42: #{tpu_custom_call.1} parent=0
    _
  %s10 = ssub.s32 1, %s8
  %s11 = scalar_select 0, %s10, %s8
  $region1: #{tpu_custom_call.1} parent=0
    #allocation2 [shape = 'u8[65536]{0}', space=vmem, size = 0x10000, scoped, tag = 'input window, operand 3, single buffered']
    #allocation3 [shape = 's32[1]{0}', space=sflag, size = 0x4, scoped, tag = 'scoped memory for tpu_custom_call.1']
    #allocation4 [shape = 's32[1]{0}', space=sflag, size = 0x4, scoped, tag = 'scoped memory for tpu_custom_call.1']
    #allocation5 [shape = 'u8[131072]{0}', space=vmem, size = 0x20000, scoped, tag = 'output window, operand 0, single buffered']
    %12 = vsyncpa [#allocation3], 0
    %13 = vsyncpa [#allocation4], 0
    // Predicated region
    $region2: #{tpu_custom_call.1} parent=1 // pred_check
      _
    $region3: #{tpu_custom_call.1} parent=1 // pred_check_branch
      %15 = sbr.rel (0) target = $region5
    $region4: #{tpu_custom_call.1} parent=1 // pred_region
      _
    $region5: #{tpu_custom_call.1} parent=1 // pred_fallthru
      _
    // Predicated region
    $region6: #{tpu_custom_call.1} parent=1 // pred_check
      _
    $region7: #{tpu_custom_call.1} parent=1 // pred_check_branch
      %17 = sbr.rel (0) target = $region9
    $region8: #{tpu_custom_call.1} parent=1 // pred_region
      _
    $region9: #{tpu_custom_call.1} parent=1 // pred_fallthru
      _
    // Predicated region
    $region10: #{tpu_custom_call.1} parent=1 // pred_check
      _
    $region11: #{tpu_custom_call.1} parent=1 // pred_check_branch
      %19 = sbr.rel (0) target = $region13
    $region12: #{tpu_custom_call.1} parent=1 // pred_region
      _
    $region13: #{tpu_custom_call.1} parent=1 // pred_fallthru
      _
    // Predicated region
    $region14: #{tpu_custom_call.1} parent=1 // pred_check
      _
    $region15: #{tpu_custom_call.1} parent=1 // pred_check_branch
      %21 = sbr.rel (0) target = $region17
    $region16: #{tpu_custom_call.1} parent=1 // pred_region
      %s23 = ssub.s32 2048, 2048
      %24 = vsyncadd [#allocation3], %s23
      %s25 = sshll.u32 [#allocation2], 4
      %s26 = int_to_ptr.vmem [resolvable:$true] %s25
      %31 = dma.hbm_to_vmem [thread:$0]  %s3, 2048, %s26, [#allocation3], 128, 128, 8
    $region17: #{tpu_custom_call.1} parent=1 // pred_fallthru
      _
    // Predicated region
    $region18: #{tpu_custom_call.1} parent=1 // pred_check
      _
    $region19: #{tpu_custom_call.1} parent=1 // pred_check_branch
      %33 = sbr.rel (0) target = $region21
    $region20: #{tpu_custom_call.1} parent=1 // pred_region
      _
    $region21: #{tpu_custom_call.1} parent=1 // pred_fallthru
      _
    // Predicated region
    $region22: #{tpu_custom_call.1} parent=1 // pred_check
      _
    $region23: #{tpu_custom_call.1} parent=1 // pred_check_branch
      %35 = sbr.rel (0) target = $region25
    $region24: #{tpu_custom_call.1} parent=1 // pred_region
      _
    $region25: #{tpu_custom_call.1} parent=1 // pred_fallthru
      _
    // Predicated region
    $region26: #{tpu_custom_call.1} parent=1 // pred_check
      _
    $region27: #{tpu_custom_call.1} parent=1 // pred_check_branch
      %37 = sbr.rel (0) target = $region29
    $region28: #{tpu_custom_call.1} parent=1 // pred_region
      _
    $region29: #{tpu_custom_call.1} parent=1 // pred_fallthru
      _
    // Predicated region
    $region30: #{tpu_custom_call.1} parent=1 // pred_check
      _
    $region31: #{tpu_custom_call.1} parent=1 // pred_check_branch
      %39 = sbr.rel (0) target = $region33
    $region32: #{tpu_custom_call.1} parent=1 // pred_region
      %40 = dma.done [#allocation3], 2048
    $region33: #{tpu_custom_call.1} parent=1 // pred_fallthru
      _
    %v41 = vld [vmem:[%s0] sm:$0xff]
    %v42 = vld [vmem:[%s0 + $0x8] sm:$0xff]
    %v43 = vld [vmem:[%s0 + $0x10] sm:$0xff]
    %v44 = vld [vmem:[%s0 + $0x18] sm:$0xff]
    %v45 = vld [vmem:[%s0 + $0x20] sm:$0xff]
    %v46 = vld [vmem:[%s0 + $0x28] sm:$0xff]
    %v47 = vld [vmem:[%s0 + $0x30] sm:$0xff]
    %v48 = vld [vmem:[%s0 + $0x38] sm:$0xff]
    %v49 = vld [vmem:[%s0 + $0x40] sm:$0xff]
    %v50 = vld [vmem:[%s0 + $0x48] sm:$0xff]
    %v51 = vld [vmem:[%s0 + $0x50] sm:$0xff]
    %v52 = vld [vmem:[%s0 + $0x58] sm:$0xff]
    %v53 = vld [vmem:[%s0 + $0x60] sm:$0xff]
    %v54 = vld [vmem:[%s0 + $0x68] sm:$0xff]
    %v55 = vld [vmem:[%s0 + $0x70] sm:$0xff]
    %v56 = vld [vmem:[%s0 + $0x78] sm:$0xff]
    %v57 = vld [vmem:[%s0 + $0x80] sm:$0xff]
    %v58 = vld [vmem:[%s0 + $0x88] sm:$0xff]
    %v59 = vld [vmem:[%s0 + $0x90] sm:$0xff]
    %v60 = vld [vmem:[%s0 + $0x98] sm:$0xff]
    %v61 = vld [vmem:[%s0 + $0xa0] sm:$0xff]
    %v62 = vld [vmem:[%s0 + $0xa8] sm:$0xff]
    %v63 = vld [vmem:[%s0 + $0xb0] sm:$0xff]
    %v64 = vld [vmem:[%s0 + $0xb8] sm:$0xff]
    %v65 = vld [vmem:[%s0 + $0xc0] sm:$0xff]
    %v66 = vld [vmem:[%s0 + $0xc8] sm:$0xff]
    %v67 = vld [vmem:[%s0 + $0xd0] sm:$0xff]
    %v68 = vld [vmem:[%s0 + $0xd8] sm:$0xff]
    %v69 = vld [vmem:[%s0 + $0xe0] sm:$0xff]
    %v70 = vld [vmem:[%s0 + $0xe8] sm:$0xff]
    %v71 = vld [vmem:[%s0 + $0xf0] sm:$0xff]
    %v72 = vld [vmem:[%s0 + $0xf8] sm:$0xff]
    %v73 = vmin.f32 %v41, 10.0
    %v74 = vmin.f32 %v42, 10.0
    %v75 = vmin.f32 %v43, 10.0
    %v76 = vmin.f32 %v44, 10.0
    %v77 = vmin.f32 %v45, 10.0
    %v78 = vmin.f32 %v46, 10.0
    %v79 = vmin.f32 %v47, 10.0
    %v80 = vmin.f32 %v48, 10.0
    %v81 = vmin.f32 %v49, 10.0
    %v82 = vmin.f32 %v50, 10.0
    %v83 = vmin.f32 %v51, 10.0
    %v84 = vmin.f32 %v52, 10.0
    %v85 = vmin.f32 %v53, 10.0
    %v86 = vmin.f32 %v54, 10.0
    %v87 = vmin.f32 %v55, 10.0
    %v88 = vmin.f32 %v56, 10.0
    %v89 = vmin.f32 %v57, 10.0
    %v90 = vmin.f32 %v58, 10.0
    %v91 = vmin.f32 %v59, 10.0
    %v92 = vmin.f32 %v60, 10.0
    %v93 = vmin.f32 %v61, 10.0
    %v94 = vmin.f32 %v62, 10.0
    %v95 = vmin.f32 %v63, 10.0
    %v96 = vmin.f32 %v64, 10.0
    %v97 = vmin.f32 %v65, 10.0
    %v98 = vmin.f32 %v66, 10.0
    %v99 = vmin.f32 %v67, 10.0
    %v100 = vmin.f32 %v68, 10.0
    %v101 = vmin.f32 %v69, 10.0
    %v102 = vmin.f32 %v70, 10.0
    %v103 = vmin.f32 %v71, 10.0
    %v104 = vmin.f32 %v72, 10.0
    %v105 = vld [vmem:[%s1] sm:$0x1]
    %107 = vset.pattern.permute.xlu0 0
    %108 = vperm.xlu0 %107, %v73
    %v109 = vpop.permute.xlu0 %108
    %112 = vset.pattern.permute.xlu0 0
    %113 = vperm.xlu0 %112, %v74
    %v114 = vpop.permute.xlu0 %113
    %117 = vset.pattern.permute.xlu0 0
    %118 = vperm.xlu0 %117, %v75
    %v119 = vpop.permute.xlu0 %118
    %122 = vset.pattern.permute.xlu0 0
    %123 = vperm.xlu0 %122, %v76
    %v124 = vpop.permute.xlu0 %123
    %127 = vset.pattern.permute.xlu0 0
    %128 = vperm.xlu0 %127, %v77
    %v129 = vpop.permute.xlu0 %128
    %132 = vset.pattern.permute.xlu0 0
    %133 = vperm.xlu0 %132, %v78
    %v134 = vpop.permute.xlu0 %133
    %137 = vset.pattern.permute.xlu0 0
    %138 = vperm.xlu0 %137, %v79
    %v139 = vpop.permute.xlu0 %138
    %142 = vset.pattern.permute.xlu0 0
    %143 = vperm.xlu0 %142, %v80
    %v144 = vpop.permute.xlu0 %143
    %147 = vset.pattern.permute.xlu0 0
    %148 = vperm.xlu0 %147, %v81
    %v149 = vpop.permute.xlu0 %148
    %152 = vset.pattern.permute.xlu0 0
    %153 = vperm.xlu0 %152, %v82
    %v154 = vpop.permute.xlu0 %153
    %157 = vset.pattern.permute.xlu0 0
    %158 = vperm.xlu0 %157, %v83
    %v159 = vpop.permute.xlu0 %158
    %162 = vset.pattern.permute.xlu0 0
    %163 = vperm.xlu0 %162, %v84
    %v164 = vpop.permute.xlu0 %163
    %167 = vset.pattern.permute.xlu0 0
    %168 = vperm.xlu0 %167, %v85
    %v169 = vpop.permute.xlu0 %168
    %172 = vset.pattern.permute.xlu0 0
    %173 = vperm.xlu0 %172, %v86
    %v174 = vpop.permute.xlu0 %173
    %177 = vset.pattern.permute.xlu0 0
    %178 = vperm.xlu0 %177, %v87
    %v179 = vpop.permute.xlu0 %178
    %182 = vset.pattern.permute.xlu0 0
    %183 = vperm.xlu0 %182, %v88
    %v184 = vpop.permute.xlu0 %183
    %187 = vset.pattern.permute.xlu0 0
    %188 = vperm.xlu0 %187, %v89
    %v189 = vpop.permute.xlu0 %188
    %192 = vset.pattern.permute.xlu0 0
    %193 = vperm.xlu0 %192, %v90
    %v194 = vpop.permute.xlu0 %193
    %197 = vset.pattern.permute.xlu0 0
    %198 = vperm.xlu0 %197, %v91
    %v199 = vpop.permute.xlu0 %198
    %202 = vset.pattern.permute.xlu0 0
    %203 = vperm.xlu0 %202, %v92
    %v204 = vpop.permute.xlu0 %203
    %207 = vset.pattern.permute.xlu0 0
    %208 = vperm.xlu0 %207, %v93
    %v209 = vpop.permute.xlu0 %208
    %212 = vset.pattern.permute.xlu0 0
    %213 = vperm.xlu0 %212, %v94
    %v214 = vpop.permute.xlu0 %213
    %217 = vset.pattern.permute.xlu0 0
    %218 = vperm.xlu0 %217, %v95
    %v219 = vpop.permute.xlu0 %218
    %222 = vset.pattern.permute.xlu0 0
    %223 = vperm.xlu0 %222, %v96
    %v224 = vpop.permute.xlu0 %223
    %227 = vset.pattern.permute.xlu0 0
    %228 = vperm.xlu0 %227, %v97
    %v229 = vpop.permute.xlu0 %228
    %232 = vset.pattern.permute.xlu0 0
    %233 = vperm.xlu0 %232, %v98
    %v234 = vpop.permute.xlu0 %233
    %237 = vset.pattern.permute.xlu0 0
    %238 = vperm.xlu0 %237, %v99
    %v239 = vpop.permute.xlu0 %238
    %242 = vset.pattern.permute.xlu0 0
    %243 = vperm.xlu0 %242, %v100
    %v244 = vpop.permute.xlu0 %243
    %247 = vset.pattern.permute.xlu0 0
    %248 = vperm.xlu0 %247, %v101
    %v249 = vpop.permute.xlu0 %248
    %252 = vset.pattern.permute.xlu0 0
    %253 = vperm.xlu0 %252, %v102
    %v254 = vpop.permute.xlu0 %253
    %257 = vset.pattern.permute.xlu0 0
    %258 = vperm.xlu0 %257, %v103
    %v259 = vpop.permute.xlu0 %258
    %262 = vset.pattern.permute.xlu0 0
    %263 = vperm.xlu0 %262, %v104
    %v264 = vpop.permute.xlu0 %263
    %v267 = vlaneseq
    %v268 = vshrl.u32 %v267, 7
    %v269 = vsub.s32 0, %v268
    %v270 = vrot.slane %v105, %v269
    %v272 = vmul.f32 %v109, %v270
    %v273 = vmul.f32 %v114, %v270
    %v274 = vmul.f32 %v119, %v270
    %v275 = vmul.f32 %v124, %v270
    %v276 = vmul.f32 %v129, %v270
    %v277 = vmul.f32 %v134, %v270
    %v278 = vmul.f32 %v139, %v270
    %v279 = vmul.f32 %v144, %v270
    %v280 = vmul.f32 %v149, %v270
    %v281 = vmul.f32 %v154, %v270
    %v282 = vmul.f32 %v159, %v270
    %v283 = vmul.f32 %v164, %v270
    %v284 = vmul.f32 %v169, %v270
    %v285 = vmul.f32 %v174, %v270
    %v286 = vmul.f32 %v179, %v270
    %v287 = vmul.f32 %v184, %v270
    %v288 = vmul.f32 %v189, %v270
    %v289 = vmul.f32 %v194, %v270
    %v290 = vmul.f32 %v199, %v270
    %v291 = vmul.f32 %v204, %v270
    %v292 = vmul.f32 %v209, %v270
    %v293 = vmul.f32 %v214, %v270
    %v294 = vmul.f32 %v219, %v270
    %v295 = vmul.f32 %v224, %v270
    %v296 = vmul.f32 %v229, %v270
    %v297 = vmul.f32 %v234, %v270
    %v298 = vmul.f32 %v239, %v270
    %v299 = vmul.f32 %v244, %v270
    %v300 = vmul.f32 %v249, %v270
    %v301 = vmul.f32 %v254, %v270
    %v302 = vmul.f32 %v259, %v270
    %v303 = vmul.f32 %v264, %v270
    %v304 = vld [vmem:[%s2] sm:$0x1]
    %v306 = vlaneseq
    %v307 = vshrl.u32 %v306, 7
    %v308 = vsub.s32 0, %v307
    %v309 = vrot.slane %v304, %v308
    %v311 = vadd.f32 %v272, %v309
    %v312 = vadd.f32 %v273, %v309
    %v313 = vadd.f32 %v274, %v309
    %v314 = vadd.f32 %v275, %v309
    %v315 = vadd.f32 %v276, %v309
    %v316 = vadd.f32 %v277, %v309
    %v317 = vadd.f32 %v278, %v309
    %v318 = vadd.f32 %v279, %v309
    %v319 = vadd.f32 %v280, %v309
    %v320 = vadd.f32 %v281, %v309
    %v321 = vadd.f32 %v282, %v309
    %v322 = vadd.f32 %v283, %v309
    %v323 = vadd.f32 %v284, %v309
    %v324 = vadd.f32 %v285, %v309
    %v325 = vadd.f32 %v286, %v309
    %v326 = vadd.f32 %v287, %v309
    %v327 = vadd.f32 %v288, %v309
    %v328 = vadd.f32 %v289, %v309
    %v329 = vadd.f32 %v290, %v309
    %v330 = vadd.f32 %v291, %v309
    %v331 = vadd.f32 %v292, %v309
    %v332 = vadd.f32 %v293, %v309
    %v333 = vadd.f32 %v294, %v309
    %v334 = vadd.f32 %v295, %v309
    %v335 = vadd.f32 %v296, %v309
    %v336 = vadd.f32 %v297, %v309
    %v337 = vadd.f32 %v298, %v309
    %v338 = vadd.f32 %v299, %v309
    %v339 = vadd.f32 %v300, %v309
    %v340 = vadd.f32 %v301, %v309
    %v341 = vadd.f32 %v302, %v309
    %v342 = vadd.f32 %v303, %v309
    %v343 = vmax.f32 %v311, 0.0
    %v344 = vmax.f32 %v312, 0.0
    %v345 = vmax.f32 %v313, 0.0
    %v346 = vmax.f32 %v314, 0.0
    %v347 = vmax.f32 %v315, 0.0
    %v348 = vmax.f32 %v316, 0.0
    %v349 = vmax.f32 %v317, 0.0
    %v350 = vmax.f32 %v318, 0.0
    %v351 = vmax.f32 %v319, 0.0
    %v352 = vmax.f32 %v320, 0.0
    %v353 = vmax.f32 %v321, 0.0
    %v354 = vmax.f32 %v322, 0.0
    %v355 = vmax.f32 %v323, 0.0
    %v356 = vmax.f32 %v324, 0.0
    %v357 = vmax.f32 %v325, 0.0
    %v358 = vmax.f32 %v326, 0.0
    %v359 = vmax.f32 %v327, 0.0
    %v360 = vmax.f32 %v328, 0.0
    %v361 = vmax.f32 %v329, 0.0
    %v362 = vmax.f32 %v330, 0.0
    %v363 = vmax.f32 %v331, 0.0
    %v364 = vmax.f32 %v332, 0.0
    %v365 = vmax.f32 %v333, 0.0
    %v366 = vmax.f32 %v334, 0.0
    %v367 = vmax.f32 %v335, 0.0
    %v368 = vmax.f32 %v336, 0.0
    %v369 = vmax.f32 %v337, 0.0
    %v370 = vmax.f32 %v338, 0.0
    %v371 = vmax.f32 %v339, 0.0
    %v372 = vmax.f32 %v340, 0.0
    %v373 = vmax.f32 %v341, 0.0
    %v374 = vmax.f32 %v342, 0.0
    %v375 = vld [vmem:[#allocation2] sm:$0xff]
    %v376 = vld [vmem:[#allocation2 + $0x8] sm:$0xff]
    %v377 = vld [vmem:[#allocation2 + $0x10] sm:$0xff]
    %v378 = vld [vmem:[#allocation2 + $0x18] sm:$0xff]
    %v379 = vld [vmem:[#allocation2 + $0x20] sm:$0xff]
    %v380 = vld [vmem:[#allocation2 + $0x28] sm:$0xff]
    %v381 = vld [vmem:[#allocation2 + $0x30] sm:$0xff]
    %v382 = vld [vmem:[#allocation2 + $0x38] sm:$0xff]
    %v383 = vld [vmem:[#allocation2 + $0x40] sm:$0xff]
    %v384 = vld [vmem:[#allocation2 + $0x48] sm:$0xff]
    %v385 = vld [vmem:[#allocation2 + $0x50] sm:$0xff]
    %v386 = vld [vmem:[#allocation2 + $0x58] sm:$0xff]
    %v387 = vld [vmem:[#allocation2 + $0x60] sm:$0xff]
    %v388 = vld [vmem:[#allocation2 + $0x68] sm:$0xff]
    %v389 = vld [vmem:[#allocation2 + $0x70] sm:$0xff]
    %v390 = vld [vmem:[#allocation2 + $0x78] sm:$0xff]
    %v391 = vld [vmem:[%s4] sm:$0x1]
    %v393 = vlaneseq
    %v394 = vshrl.u32 %v393, 7
    %v395 = vsub.s32 0, %v394
    %v396 = vrot.slane %v391, %v395
    %398 = vmatprep.subr.mxu0 0.0
    %399 = vmatpush1.msra.mxu0 %v375
    %400 = vmatprep.subr.mxu0 0.0
    %401 = vmatpush1.msra.mxu0 %v376
    %402 = vmatprep.subr.mxu0 0.0
    %403 = vmatpush1.msra.mxu0 %v377
    %404 = vmatprep.subr.mxu0 0.0
    %405 = vmatpush1.msra.mxu0 %v378
    %406 = vmatprep.subr.mxu0 0.0
    %407 = vmatpush1.msra.mxu0 %v379
    %408 = vmatprep.subr.mxu0 0.0
    %409 = vmatpush1.msra.mxu0 %v380
    %410 = vmatprep.subr.mxu0 0.0
    %411 = vmatpush1.msra.mxu0 %v381
    %412 = vmatprep.subr.mxu0 0.0
    %413 = vmatpush1.msra.mxu0 %v382
    %414 = vmatprep.subr.mxu0 0.0
    %415 = vmatpush1.msra.mxu0 %v383
    %416 = vmatprep.subr.mxu0 0.0
    %417 = vmatpush1.msra.mxu0 %v384
    %418 = vmatprep.subr.mxu0 0.0
    %419 = vmatpush1.msra.mxu0 %v385
    %420 = vmatprep.subr.mxu0 0.0
    %421 = vmatpush1.msra.mxu0 %v386
    %422 = vmatprep.subr.mxu0 0.0
    %423 = vmatpush1.msra.mxu0 %v387
    %424 = vmatprep.subr.mxu0 0.0
    %425 = vmatpush1.msra.mxu0 %v388
    %426 = vmatprep.subr.mxu0 0.0
    %427 = vmatpush1.msra.mxu0 %v389
    %428 = vmatprep.subr.mxu0 0.0
    %429 = vmatpush1.msra.mxu0 %v390
    %430 = vmatprep.subr.mxu0 0.0
    %431 = vmatpush1.msra.mxu0 0.0
    %432 = vmatprep.subr.mxu0 0.0
    %433 = vmatpush1.msra.mxu0 0.0
    %434 = vmatprep.subr.mxu0 0.0
    %435 = vmatpush1.msra.mxu0 0.0
    %436 = vmatprep.subr.mxu0 0.0
    %437 = vmatpush1.msra.mxu0 0.0
    %438 = vmatprep.subr.mxu0 0.0
    %439 = vmatpush1.msra.mxu0 0.0
    %440 = vmatprep.subr.mxu0 0.0
    %441 = vmatpush1.msra.mxu0 0.0
    %442 = vmatprep.subr.mxu0 0.0
    %443 = vmatpush1.msra.mxu0 0.0
    %444 = vmatprep.subr.mxu0 0.0
    %445 = vmatpush1.msra.mxu0 0.0
    %446 = vmatprep.subr.mxu0 0.0
    %447 = vmatpush1.msra.mxu0 0.0
    %448 = vmatprep.subr.mxu0 0.0
    %449 = vmatpush1.msra.mxu0 0.0
    %450 = vmatprep.subr.mxu0 0.0
    %451 = vmatpush1.msra.mxu0 0.0
    %452 = vmatprep.subr.mxu0 0.0
    %453 = vmatpush1.msra.mxu0 0.0
    %454 = vmatprep.subr.mxu0 0.0
    %455 = vmatpush1.msra.mxu0 0.0
    %456 = vmatprep.subr.mxu0 0.0
    %457 = vmatpush1.msra.mxu0 0.0
    %458 = vmatprep.subr.mxu0 0.0
    %459 = vmatpush1.msra.mxu0 0.0
    %460 = vmatprep.subr.mxu0 0.0
    %461 = vmatpush1.msra.mxu0 0.0
    %462 = vmatprep.mubr.f32.mxu0 0.0
    %463 = vmatmul.mubr.f32.gmra.mrb[0].mxu0 %v343
    %v464 = vpop.f32.mrb[0].mxu0
    %v465 = vadd.f32 %v396, %v464
    %v466 = vpop.f32.mrb[0].mxu0
    %467 = vmatprep.mubr.f32.mxu0 0.0
    %468 = vmatmul.mubr.f32.gmra.mrb[0].mxu0 %v344
    %v469 = vpop.f32.mrb[0].mxu0
    %v470 = vadd.f32 %v396, %v469
    %v471 = vpop.f32.mrb[0].mxu0
    %472 = vmatprep.mubr.f32.mxu0 0.0
    %473 = vmatmul.mubr.f32.gmra.mrb[0].mxu0 %v345
    %v474 = vpop.f32.mrb[0].mxu0
    %v475 = vadd.f32 %v396, %v474
    %v476 = vpop.f32.mrb[0].mxu0
    %477 = vmatprep.mubr.f32.mxu0 0.0
    %478 = vmatmul.mubr.f32.gmra.mrb[0].mxu0 %v346
    %v479 = vpop.f32.mrb[0].mxu0
    %v480 = vadd.f32 %v396, %v479
    %v481 = vpop.f32.mrb[0].mxu0
    %482 = vmatprep.mubr.f32.mxu0 0.0
    %483 = vmatmul.mubr.f32.gmra.mrb[0].mxu0 %v347
    %v484 = vpop.f32.mrb[0].mxu0
    %v485 = vadd.f32 %v396, %v484
    %v486 = vpop.f32.mrb[0].mxu0
    %487 = vmatprep.mubr.f32.mxu0 0.0
    %488 = vmatmul.mubr.f32.gmra.mrb[0].mxu0 %v348
    %v489 = vpop.f32.mrb[0].mxu0
    %v490 = vadd.f32 %v396, %v489
    %v491 = vpop.f32.mrb[0].mxu0
    %492 = vmatprep.mubr.f32.mxu0 0.0
    %493 = vmatmul.mubr.f32.gmra.mrb[0].mxu0 %v349
    %v494 = vpop.f32.mrb[0].mxu0
    %v495 = vadd.f32 %v396, %v494
    %v496 = vpop.f32.mrb[0].mxu0
    %497 = vmatprep.mubr.f32.mxu0 0.0
    %498 = vmatmul.mubr.f32.gmra.mrb[0].mxu0 %v350
    %v499 = vpop.f32.mrb[0].mxu0
    %v500 = vadd.f32 %v396, %v499
    %v501 = vpop.f32.mrb[0].mxu0
    %502 = vmatprep.mubr.f32.mxu0 0.0
    %503 = vmatmul.mubr.f32.gmra.mrb[0].mxu0 %v351
    %v504 = vpop.f32.mrb[0].mxu0
    %v505 = vadd.f32 %v396, %v504
    %v506 = vpop.f32.mrb[0].mxu0
    %507 = vmatprep.mubr.f32.mxu0 0.0
    %508 = vmatmul.mubr.f32.gmra.mrb[0].mxu0 %v352
    %v509 = vpop.f32.mrb[0].mxu0
    %v510 = vadd.f32 %v396, %v509
    %v511 = vpop.f32.mrb[0].mxu0
    %512 = vmatprep.mubr.f32.mxu0 0.0
    %513 = vmatmul.mubr.f32.gmra.mrb[0].mxu0 %v353
    %v514 = vpop.f32.mrb[0].mxu0
    %v515 = vadd.f32 %v396, %v514
    %v516 = vpop.f32.mrb[0].mxu0
    %517 = vmatprep.mubr.f32.mxu0 0.0
    %518 = vmatmul.mubr.f32.gmra.mrb[0].mxu0 %v354
    %v519 = vpop.f32.mrb[0].mxu0
    %v520 = vadd.f32 %v396, %v519
    %v521 = vpop.f32.mrb[0].mxu0
    %522 = vmatprep.mubr.f32.mxu0 0.0
    %523 = vmatmul.mubr.f32.gmra.mrb[0].mxu0 %v355
    %v524 = vpop.f32.mrb[0].mxu0
    %v525 = vadd.f32 %v396, %v524
    %v526 = vpop.f32.mrb[0].mxu0
    %527 = vmatprep.mubr.f32.mxu0 0.0
    %528 = vmatmul.mubr.f32.gmra.mrb[0].mxu0 %v356
    %v529 = vpop.f32.mrb[0].mxu0
    %v530 = vadd.f32 %v396, %v529
    %v531 = vpop.f32.mrb[0].mxu0
    %532 = vmatprep.mubr.f32.mxu0 0.0
    %533 = vmatmul.mubr.f32.gmra.mrb[0].mxu0 %v357
    %v534 = vpop.f32.mrb[0].mxu0
    %v535 = vadd.f32 %v396, %v534
    %v536 = vpop.f32.mrb[0].mxu0
    %537 = vmatprep.mubr.f32.mxu0 0.0
    %538 = vmatmul.mubr.f32.gmra.mrb[0].mxu0 %v358
    %v539 = vpop.f32.mrb[0].mxu0
    %v540 = vadd.f32 %v396, %v539
    %v541 = vpop.f32.mrb[0].mxu0
    %542 = vmatprep.mubr.f32.mxu0 0.0
    %543 = vmatmul.mubr.f32.gmra.mrb[0].mxu0 %v359
    %v544 = vpop.f32.mrb[0].mxu0
    %v545 = vadd.f32 %v396, %v544
    %v546 = vpop.f32.mrb[0].mxu0
    %547 = vmatprep.mubr.f32.mxu0 0.0
    %548 = vmatmul.mubr.f32.gmra.mrb[0].mxu0 %v360
    %v549 = vpop.f32.mrb[0].mxu0
    %v550 = vadd.f32 %v396, %v549
    %v551 = vpop.f32.mrb[0].mxu0
    %552 = vmatprep.mubr.f32.mxu0 0.0
    %553 = vmatmul.mubr.f32.gmra.mrb[0].mxu0 %v361
    %v554 = vpop.f32.mrb[0].mxu0
    %v555 = vadd.f32 %v396, %v554
    %v556 = vpop.f32.mrb[0].mxu0
    %557 = vmatprep.mubr.f32.mxu0 0.0
    %558 = vmatmul.mubr.f32.gmra.mrb[0].mxu0 %v362
    %v559 = vpop.f32.mrb[0].mxu0
    %v560 = vadd.f32 %v396, %v559
    %v561 = vpop.f32.mrb[0].mxu0
    %562 = vmatprep.mubr.f32.mxu0 0.0
    %563 = vmatmul.mubr.f32.gmra.mrb[0].mxu0 %v363
    %v564 = vpop.f32.mrb[0].mxu0
    %v565 = vadd.f32 %v396, %v564
    %v566 = vpop.f32.mrb[0].mxu0
    %567 = vmatprep.mubr.f32.mxu0 0.0
    %568 = vmatmul.mubr.f32.gmra.mrb[0].mxu0 %v364
    %v569 = vpop.f32.mrb[0].mxu0
    %v570 = vadd.f32 %v396, %v569
    %v571 = vpop.f32.mrb[0].mxu0
    %572 = vmatprep.mubr.f32.mxu0 0.0
    %573 = vmatmul.mubr.f32.gmra.mrb[0].mxu0 %v365
    %v574 = vpop.f32.mrb[0].mxu0
    %v575 = vadd.f32 %v396, %v574
    %v576 = vpop.f32.mrb[0].mxu0
    %577 = vmatprep.mubr.f32.mxu0 0.0
    %578 = vmatmul.mubr.f32.gmra.mrb[0].mxu0 %v366
    %v579 = vpop.f32.mrb[0].mxu0
    %v580 = vadd.f32 %v396, %v579
    %v581 = vpop.f32.mrb[0].mxu0
    %582 = vmatprep.mubr.f32.mxu0 0.0
    %583 = vmatmul.mubr.f32.gmra.mrb[0].mxu0 %v367
    %v584 = vpop.f32.mrb[0].mxu0
    %v585 = vadd.f32 %v396, %v584
    %v586 = vpop.f32.mrb[0].mxu0
    %587 = vmatprep.mubr.f32.mxu0 0.0
    %588 = vmatmul.mubr.f32.gmra.mrb[0].mxu0 %v368
    %v589 = vpop.f32.mrb[0].mxu0
    %v590 = vadd.f32 %v396, %v589
    %v591 = vpop.f32.mrb[0].mxu0
    %592 = vmatprep.mubr.f32.mxu0 0.0
    %593 = vmatmul.mubr.f32.gmra.mrb[0].mxu0 %v369
    %v594 = vpop.f32.mrb[0].mxu0
    %v595 = vadd.f32 %v396, %v594
    %v596 = vpop.f32.mrb[0].mxu0
    %597 = vmatprep.mubr.f32.mxu0 0.0
    %598 = vmatmul.mubr.f32.gmra.mrb[0].mxu0 %v370
    %v599 = vpop.f32.mrb[0].mxu0
    %v600 = vadd.f32 %v396, %v599
    %v601 = vpop.f32.mrb[0].mxu0
    %602 = vmatprep.mubr.f32.mxu0 0.0
    %603 = vmatmul.mubr.f32.gmra.mrb[0].mxu0 %v371
    %v604 = vpop.f32.mrb[0].mxu0
    %v605 = vadd.f32 %v396, %v604
    %v606 = vpop.f32.mrb[0].mxu0
    %607 = vmatprep.mubr.f32.mxu0 0.0
    %608 = vmatmul.mubr.f32.gmra.mrb[0].mxu0 %v372
    %v609 = vpop.f32.mrb[0].mxu0
    %v610 = vadd.f32 %v396, %v609
    %v611 = vpop.f32.mrb[0].mxu0
    %612 = vmatprep.mubr.f32.mxu0 0.0
    %613 = vmatmul.mubr.f32.gmra.mrb[0].mxu0 %v373
    %v614 = vpop.f32.mrb[0].mxu0
    %v615 = vadd.f32 %v396, %v614
    %v616 = vpop.f32.mrb[0].mxu0
    %617 = vmatprep.mubr.f32.mxu0 0.0
    %618 = vmatmul.mubr.f32.gmra.mrb[0].mxu0 %v374
    %v619 = vpop.f32.mrb[0].mxu0
    %v620 = vadd.f32 %v396, %v619
    %v621 = vpop.f32.mrb[0].mxu0
    %622 = vdwg.mxu0
    %623 = vadd.xlane.f32.xlu0 %v465
    %v624 = vpop.xlane.xlu0 %623
    %625 = vadd.xlane.f32.xlu0 %v470
    %v626 = vpop.xlane.xlu0 %625
    %627 = vadd.xlane.f32.xlu0 %v475
    %v628 = vpop.xlane.xlu0 %627
    %629 = vadd.xlane.f32.xlu0 %v480
    %v630 = vpop.xlane.xlu0 %629
    %631 = vadd.xlane.f32.xlu0 %v485
    %v632 = vpop.xlane.xlu0 %631
    %633 = vadd.xlane.f32.xlu0 %v490
    %v634 = vpop.xlane.xlu0 %633
    %635 = vadd.xlane.f32.xlu0 %v495
    %v636 = vpop.xlane.xlu0 %635
    %637 = vadd.xlane.f32.xlu0 %v500
    %v638 = vpop.xlane.xlu0 %637
    %639 = vadd.xlane.f32.xlu0 %v505
    %v640 = vpop.xlane.xlu0 %639
    %641 = vadd.xlane.f32.xlu0 %v510
    %v642 = vpop.xlane.xlu0 %641
    %643 = vadd.xlane.f32.xlu0 %v515
    %v644 = vpop.xlane.xlu0 %643
    %645 = vadd.xlane.f32.xlu0 %v520
    %v646 = vpop.xlane.xlu0 %645
    %647 = vadd.xlane.f32.xlu0 %v525
    %v648 = vpop.xlane.xlu0 %647
    %649 = vadd.xlane.f32.xlu0 %v530
    %v650 = vpop.xlane.xlu0 %649
    %651 = vadd.xlane.f32.xlu0 %v535
    %v652 = vpop.xlane.xlu0 %651
    %653 = vadd.xlane.f32.xlu0 %v540
    %v654 = vpop.xlane.xlu0 %653
    %655 = vadd.xlane.f32.xlu0 %v545
    %v656 = vpop.xlane.xlu0 %655
    %657 = vadd.xlane.f32.xlu0 %v550
    %v658 = vpop.xlane.xlu0 %657
    %659 = vadd.xlane.f32.xlu0 %v555
    %v660 = vpop.xlane.xlu0 %659
    %661 = vadd.xlane.f32.xlu0 %v560
    %v662 = vpop.xlane.xlu0 %661
    %663 = vadd.xlane.f32.xlu0 %v565
    %v664 = vpop.xlane.xlu0 %663
    %665 = vadd.xlane.f32.xlu0 %v570
    %v666 = vpop.xlane.xlu0 %665
    %667 = vadd.xlane.f32.xlu0 %v575
    %v668 = vpop.xlane.xlu0 %667
    %669 = vadd.xlane.f32.xlu0 %v580
    %v670 = vpop.xlane.xlu0 %669
    %671 = vadd.xlane.f32.xlu0 %v585
    %v672 = vpop.xlane.xlu0 %671
    %673 = vadd.xlane.f32.xlu0 %v590
    %v674 = vpop.xlane.xlu0 %673
    %675 = vadd.xlane.f32.xlu0 %v595
    %v676 = vpop.xlane.xlu0 %675
    %677 = vadd.xlane.f32.xlu0 %v600
    %v678 = vpop.xlane.xlu0 %677
    %679 = vadd.xlane.f32.xlu0 %v605
    %v680 = vpop.xlane.xlu0 %679
    %681 = vadd.xlane.f32.xlu0 %v610
    %v682 = vpop.xlane.xlu0 %681
    %683 = vadd.xlane.f32.xlu0 %v615
    %v684 = vpop.xlane.xlu0 %683
    %685 = vadd.xlane.f32.xlu0 %v620
    %v686 = vpop.xlane.xlu0 %685
    %v687 = vmul.f32 %v624, 0.03125
    %v688 = vmul.f32 %v626, 0.03125
    %v689 = vmul.f32 %v628, 0.03125
    %v690 = vmul.f32 %v630, 0.03125
    %v691 = vmul.f32 %v632, 0.03125
    %v692 = vmul.f32 %v634, 0.03125
    %v693 = vmul.f32 %v636, 0.03125
    %v694 = vmul.f32 %v638, 0.03125
    %v695 = vmul.f32 %v640, 0.03125
    %v696 = vmul.f32 %v642, 0.03125
    %v697 = vmul.f32 %v644, 0.03125
    %v698 = vmul.f32 %v646, 0.03125
    %v699 = vmul.f32 %v648, 0.03125
    %v700 = vmul.f32 %v650, 0.03125
    %v701 = vmul.f32 %v652, 0.03125
    %v702 = vmul.f32 %v654, 0.03125
    %v703 = vmul.f32 %v656, 0.03125
    %v704 = vmul.f32 %v658, 0.03125
    %v705 = vmul.f32 %v660, 0.03125
    %v706 = vmul.f32 %v662, 0.03125
    %v707 = vmul.f32 %v664, 0.03125
    %v708 = vmul.f32 %v666, 0.03125
    %v709 = vmul.f32 %v668, 0.03125
    %v710 = vmul.f32 %v670, 0.03125
    %v711 = vmul.f32 %v672, 0.03125
    %v712 = vmul.f32 %v674, 0.03125
    %v713 = vmul.f32 %v676, 0.03125
    %v714 = vmul.f32 %v678, 0.03125
    %v715 = vmul.f32 %v680, 0.03125
    %v716 = vmul.f32 %v682, 0.03125
    %v717 = vmul.f32 %v684, 0.03125
    %v718 = vmul.f32 %v686, 0.03125
    %v719 = vsub.f32 %v465, %v687
    %v720 = vsub.f32 %v470, %v688
    %v721 = vsub.f32 %v475, %v689
    %v722 = vsub.f32 %v480, %v690
    %v723 = vsub.f32 %v485, %v691
    %v724 = vsub.f32 %v490, %v692
    %v725 = vsub.f32 %v495, %v693
    %v726 = vsub.f32 %v500, %v694
    %v727 = vsub.f32 %v505, %v695
    %v728 = vsub.f32 %v510, %v696
    %v729 = vsub.f32 %v515, %v697
    %v730 = vsub.f32 %v520, %v698
    %v731 = vsub.f32 %v525, %v699
    %v732 = vsub.f32 %v530, %v700
    %v733 = vsub.f32 %v535, %v701
    %v734 = vsub.f32 %v540, %v702
    %v735 = vsub.f32 %v545, %v703
    %v736 = vsub.f32 %v550, %v704
    %v737 = vsub.f32 %v555, %v705
    %v738 = vsub.f32 %v560, %v706
    %v739 = vsub.f32 %v565, %v707
    %v740 = vsub.f32 %v570, %v708
    %v741 = vsub.f32 %v575, %v709
    %v742 = vsub.f32 %v580, %v710
    %v743 = vsub.f32 %v585, %v711
    %v744 = vsub.f32 %v590, %v712
    %v745 = vsub.f32 %v595, %v713
    %v746 = vsub.f32 %v600, %v714
    %v747 = vsub.f32 %v605, %v715
    %v748 = vsub.f32 %v610, %v716
    %v749 = vsub.f32 %v615, %v717
    %v750 = vsub.f32 %v620, %v718
    %v751 = vlaneseq
    %v752 = vand.u32 %v751, 127
    %vm753 = vcmp.lt.s32.totalorder %v752, 32
    %v754 = vsel %vm753, %v719, 0.0
    %v755 = vsel %vm753, %v720, 0.0
    %v756 = vsel %vm753, %v721, 0.0
    %v757 = vsel %vm753, %v722, 0.0
    %v758 = vsel %vm753, %v723, 0.0
    %v759 = vsel %vm753, %v724, 0.0
    %v760 = vsel %vm753, %v725, 0.0
    %v761 = vsel %vm753, %v726, 0.0
    %v762 = vsel %vm753, %v727, 0.0
    %v763 = vsel %vm753, %v728, 0.0
    %v764 = vsel %vm753, %v729, 0.0
    %v765 = vsel %vm753, %v730, 0.0
    %v766 = vsel %vm753, %v731, 0.0
    %v767 = vsel %vm753, %v732, 0.0
    %v768 = vsel %vm753, %v733, 0.0
    %v769 = vsel %vm753, %v734, 0.0
    %v770 = vsel %vm753, %v735, 0.0
    %v771 = vsel %vm753, %v736, 0.0
    %v772 = vsel %vm753, %v737, 0.0
    %v773 = vsel %vm753, %v738, 0.0
    %v774 = vsel %vm753, %v739, 0.0
    %v775 = vsel %vm753, %v740, 0.0
    %v776 = vsel %vm753, %v741, 0.0
    %v777 = vsel %vm753, %v742, 0.0
    %v778 = vsel %vm753, %v743, 0.0
    %v779 = vsel %vm753, %v744, 0.0
    %v780 = vsel %vm753, %v745, 0.0
    %v781 = vsel %vm753, %v746, 0.0
    %v782 = vsel %vm753, %v747, 0.0
    %v783 = vsel %vm753, %v748, 0.0
    %v784 = vsel %vm753, %v749, 0.0
    %v785 = vsel %vm753, %v750, 0.0
    %v786 = vmul.f32 %v754, %v754
    %v787 = vmul.f32 %v755, %v755
    %v788 = vmul.f32 %v756, %v756
    %v789 = vmul.f32 %v757, %v757
    %v790 = vmul.f32 %v758, %v758
    %v791 = vmul.f32 %v759, %v759
    %v792 = vmul.f32 %v760, %v760
    %v793 = vmul.f32 %v761, %v761
    %v794 = vmul.f32 %v762, %v762
    %v795 = vmul.f32 %v763, %v763
    %v796 = vmul.f32 %v764, %v764
    %v797 = vmul.f32 %v765, %v765
    %v798 = vmul.f32 %v766, %v766
    %v799 = vmul.f32 %v767, %v767
    %v800 = vmul.f32 %v768, %v768
    %v801 = vmul.f32 %v769, %v769
    %v802 = vmul.f32 %v770, %v770
    %v803 = vmul.f32 %v771, %v771
    %v804 = vmul.f32 %v772, %v772
    %v805 = vmul.f32 %v773, %v773
    %v806 = vmul.f32 %v774, %v774
    %v807 = vmul.f32 %v775, %v775
    %v808 = vmul.f32 %v776, %v776
    %v809 = vmul.f32 %v777, %v777
    %v810 = vmul.f32 %v778, %v778
    %v811 = vmul.f32 %v779, %v779
    %v812 = vmul.f32 %v780, %v780
    %v813 = vmul.f32 %v781, %v781
    %v814 = vmul.f32 %v782, %v782
    %v815 = vmul.f32 %v783, %v783
    %v816 = vmul.f32 %v784, %v784
    %v817 = vmul.f32 %v785, %v785
    %818 = vadd.xlane.f32.xlu0 %v786
    %v819 = vpop.xlane.xlu0 %818
    %820 = vadd.xlane.f32.xlu0 %v787
    %v821 = vpop.xlane.xlu0 %820
    %822 = vadd.xlane.f32.xlu0 %v788
    %v823 = vpop.xlane.xlu0 %822
    %824 = vadd.xlane.f32.xlu0 %v789
    %v825 = vpop.xlane.xlu0 %824
    %826 = vadd.xlane.f32.xlu0 %v790
    %v827 = vpop.xlane.xlu0 %826
    %828 = vadd.xlane.f32.xlu0 %v791
    %v829 = vpop.xlane.xlu0 %828
    %830 = vadd.xlane.f32.xlu0 %v792
    %v831 = vpop.xlane.xlu0 %830
    %832 = vadd.xlane.f32.xlu0 %v793
    %v833 = vpop.xlane.xlu0 %832
    %834 = vadd.xlane.f32.xlu0 %v794
    %v835 = vpop.xlane.xlu0 %834
    %836 = vadd.xlane.f32.xlu0 %v795
    %v837 = vpop.xlane.xlu0 %836
    %838 = vadd.xlane.f32.xlu0 %v796
    %v839 = vpop.xlane.xlu0 %838
    %840 = vadd.xlane.f32.xlu0 %v797
    %v841 = vpop.xlane.xlu0 %840
    %842 = vadd.xlane.f32.xlu0 %v798
    %v843 = vpop.xlane.xlu0 %842
    %844 = vadd.xlane.f32.xlu0 %v799
    %v845 = vpop.xlane.xlu0 %844
    %846 = vadd.xlane.f32.xlu0 %v800
    %v847 = vpop.xlane.xlu0 %846
    %848 = vadd.xlane.f32.xlu0 %v801
    %v849 = vpop.xlane.xlu0 %848
    %850 = vadd.xlane.f32.xlu0 %v802
    %v851 = vpop.xlane.xlu0 %850
    %852 = vadd.xlane.f32.xlu0 %v803
    %v853 = vpop.xlane.xlu0 %852
    %854 = vadd.xlane.f32.xlu0 %v804
    %v855 = vpop.xlane.xlu0 %854
    %856 = vadd.xlane.f32.xlu0 %v805
    %v857 = vpop.xlane.xlu0 %856
    %858 = vadd.xlane.f32.xlu0 %v806
    %v859 = vpop.xlane.xlu0 %858
    %860 = vadd.xlane.f32.xlu0 %v807
    %v861 = vpop.xlane.xlu0 %860
    %862 = vadd.xlane.f32.xlu0 %v808
    %v863 = vpop.xlane.xlu0 %862
    %864 = vadd.xlane.f32.xlu0 %v809
    %v865 = vpop.xlane.xlu0 %864
    %866 = vadd.xlane.f32.xlu0 %v810
    %v867 = vpop.xlane.xlu0 %866
    %868 = vadd.xlane.f32.xlu0 %v811
    %v869 = vpop.xlane.xlu0 %868
    %870 = vadd.xlane.f32.xlu0 %v812
    %v871 = vpop.xlane.xlu0 %870
    %872 = vadd.xlane.f32.xlu0 %v813
    %v873 = vpop.xlane.xlu0 %872
    %874 = vadd.xlane.f32.xlu0 %v814
    %v875 = vpop.xlane.xlu0 %874
    %876 = vadd.xlane.f32.xlu0 %v815
    %v877 = vpop.xlane.xlu0 %876
    %878 = vadd.xlane.f32.xlu0 %v816
    %v879 = vpop.xlane.xlu0 %878
    %880 = vadd.xlane.f32.xlu0 %v817
    %v881 = vpop.xlane.xlu0 %880
    %v882 = vmul.f32 %v819, 0.03125
    %v883 = vmul.f32 %v821, 0.03125
    %v884 = vmul.f32 %v823, 0.03125
    %v885 = vmul.f32 %v825, 0.03125
    %v886 = vmul.f32 %v827, 0.03125
    %v887 = vmul.f32 %v829, 0.03125
    %v888 = vmul.f32 %v831, 0.03125
    %v889 = vmul.f32 %v833, 0.03125
    %v890 = vmul.f32 %v835, 0.03125
    %v891 = vmul.f32 %v837, 0.03125
    %v892 = vmul.f32 %v839, 0.03125
    %v893 = vmul.f32 %v841, 0.03125
    %v894 = vmul.f32 %v843, 0.03125
    %v895 = vmul.f32 %v845, 0.03125
    %v896 = vmul.f32 %v847, 0.03125
    %v897 = vmul.f32 %v849, 0.03125
    %v898 = vmul.f32 %v851, 0.03125
    %v899 = vmul.f32 %v853, 0.03125
    %v900 = vmul.f32 %v855, 0.03125
    %v901 = vmul.f32 %v857, 0.03125
    %v902 = vmul.f32 %v859, 0.03125
    %v903 = vmul.f32 %v861, 0.03125
    %v904 = vmul.f32 %v863, 0.03125
    %v905 = vmul.f32 %v865, 0.03125
    %v906 = vmul.f32 %v867, 0.03125
    %v907 = vmul.f32 %v869, 0.03125
    %v908 = vmul.f32 %v871, 0.03125
    %v909 = vmul.f32 %v873, 0.03125
    %v910 = vmul.f32 %v875, 0.03125
    %v911 = vmul.f32 %v877, 0.03125
    %v912 = vmul.f32 %v879, 0.03125
    %v913 = vmul.f32 %v881, 0.03125
    %v914 = vadd.f32 %v882, 1e-05
    %v915 = vadd.f32 %v883, 1e-05
    %v916 = vadd.f32 %v884, 1e-05
    %v917 = vadd.f32 %v885, 1e-05
    %v918 = vadd.f32 %v886, 1e-05
    %v919 = vadd.f32 %v887, 1e-05
    %v920 = vadd.f32 %v888, 1e-05
    %v921 = vadd.f32 %v889, 1e-05
    %v922 = vadd.f32 %v890, 1e-05
    %v923 = vadd.f32 %v891, 1e-05
    %v924 = vadd.f32 %v892, 1e-05
    %v925 = vadd.f32 %v893, 1e-05
    %v926 = vadd.f32 %v894, 1e-05
    %v927 = vadd.f32 %v895, 1e-05
    %v928 = vadd.f32 %v896, 1e-05
    %v929 = vadd.f32 %v897, 1e-05
    %v930 = vadd.f32 %v898, 1e-05
    %v931 = vadd.f32 %v899, 1e-05
    %v932 = vadd.f32 %v900, 1e-05
    %v933 = vadd.f32 %v901, 1e-05
    %v934 = vadd.f32 %v902, 1e-05
    %v935 = vadd.f32 %v903, 1e-05
    %v936 = vadd.f32 %v904, 1e-05
    %v937 = vadd.f32 %v905, 1e-05
    %v938 = vadd.f32 %v906, 1e-05
    %v939 = vadd.f32 %v907, 1e-05
    %v940 = vadd.f32 %v908, 1e-05
    %v941 = vadd.f32 %v909, 1e-05
    %v942 = vadd.f32 %v910, 1e-05
    %v943 = vadd.f32 %v911, 1e-05
    %v944 = vadd.f32 %v912, 1e-05
    %v945 = vadd.f32 %v913, 1e-05
    %v946 = vrsqrt.pop %v914
    %v947 = vrsqrt.pop %v915
    %v948 = vrsqrt.pop %v916
    %v949 = vrsqrt.pop %v917
    %v950 = vrsqrt.pop %v918
    %v951 = vrsqrt.pop %v919
    %v952 = vrsqrt.pop %v920
    %v953 = vrsqrt.pop %v921
    %v954 = vrsqrt.pop %v922
    %v955 = vrsqrt.pop %v923
    %v956 = vrsqrt.pop %v924
    %v957 = vrsqrt.pop %v925
    %v958 = vrsqrt.pop %v926
    %v959 = vrsqrt.pop %v927
    %v960 = vrsqrt.pop %v928
    %v961 = vrsqrt.pop %v929
    %v962 = vrsqrt.pop %v930
    %v963 = vrsqrt.pop %v931
    %v964 = vrsqrt.pop %v932
    %v965 = vrsqrt.pop %v933
    %v966 = vrsqrt.pop %v934
    %v967 = vrsqrt.pop %v935
    %v968 = vrsqrt.pop %v936
    %v969 = vrsqrt.pop %v937
    %v970 = vrsqrt.pop %v938
    %v971 = vrsqrt.pop %v939
    %v972 = vrsqrt.pop %v940
    %v973 = vrsqrt.pop %v941
    %v974 = vrsqrt.pop %v942
    %v975 = vrsqrt.pop %v943
    %v976 = vrsqrt.pop %v944
    %v977 = vrsqrt.pop %v945
    %v978 = vmul.f32 %v754, %v946
    %v979 = vmul.f32 %v755, %v947
    %v980 = vmul.f32 %v756, %v948
    %v981 = vmul.f32 %v757, %v949
    %v982 = vmul.f32 %v758, %v950
    %v983 = vmul.f32 %v759, %v951
    %v984 = vmul.f32 %v760, %v952
    %v985 = vmul.f32 %v761, %v953
    %v986 = vmul.f32 %v762, %v954
    %v987 = vmul.f32 %v763, %v955
    %v988 = vmul.f32 %v764, %v956
    %v989 = vmul.f32 %v765, %v957
    %v990 = vmul.f32 %v766, %v958
    %v991 = vmul.f32 %v767, %v959
    %v992 = vmul.f32 %v768, %v960
    %v993 = vmul.f32 %v769, %v961
    %v994 = vmul.f32 %v770, %v962
    %v995 = vmul.f32 %v771, %v963
    %v996 = vmul.f32 %v772, %v964
    %v997 = vmul.f32 %v773, %v965
    %v998 = vmul.f32 %v774, %v966
    %v999 = vmul.f32 %v775, %v967
    %v1000 = vmul.f32 %v776, %v968
    %v1001 = vmul.f32 %v777, %v969
    %v1002 = vmul.f32 %v778, %v970
    %v1003 = vmul.f32 %v779, %v971
    %v1004 = vmul.f32 %v780, %v972
    %v1005 = vmul.f32 %v781, %v973
    %v1006 = vmul.f32 %v782, %v974
    %v1007 = vmul.f32 %v783, %v975
    %v1008 = vmul.f32 %v784, %v976
    %v1009 = vmul.f32 %v785, %v977
    %v1010 = vld [vmem:[%s5] sm:$0x1]
    %v1012 = vlaneseq
    %v1013 = vshrl.u32 %v1012, 7
    %v1014 = vsub.s32 0, %v1013
    %v1015 = vrot.slane %v1010, %v1014
    %v1017 = vmul.f32 %v978, %v1015
    %v1018 = vmul.f32 %v979, %v1015
    %v1019 = vmul.f32 %v980, %v1015
    %v1020 = vmul.f32 %v981, %v1015
    %v1021 = vmul.f32 %v982, %v1015
    %v1022 = vmul.f32 %v983, %v1015
    %v1023 = vmul.f32 %v984, %v1015
    %v1024 = vmul.f32 %v985, %v1015
    %v1025 = vmul.f32 %v986, %v1015
    %v1026 = vmul.f32 %v987, %v1015
    %v1027 = vmul.f32 %v988, %v1015
    %v1028 = vmul.f32 %v989, %v1015
    %v1029 = vmul.f32 %v990, %v1015
    %v1030 = vmul.f32 %v991, %v1015
    %v1031 = vmul.f32 %v992, %v1015
    %v1032 = vmul.f32 %v993, %v1015
    %v1033 = vmul.f32 %v994, %v1015
    %v1034 = vmul.f32 %v995, %v1015
    %v1035 = vmul.f32 %v996, %v1015
    %v1036 = vmul.f32 %v997, %v1015
    %v1037 = vmul.f32 %v998, %v1015
    %v1038 = vmul.f32 %v999, %v1015
    %v1039 = vmul.f32 %v1000, %v1015
    %v1040 = vmul.f32 %v1001, %v1015
    %v1041 = vmul.f32 %v1002, %v1015
    %v1042 = vmul.f32 %v1003, %v1015
    %v1043 = vmul.f32 %v1004, %v1015
    %v1044 = vmul.f32 %v1005, %v1015
    %v1045 = vmul.f32 %v1006, %v1015
    %v1046 = vmul.f32 %v1007, %v1015
    %v1047 = vmul.f32 %v1008, %v1015
    %v1048 = vmul.f32 %v1009, %v1015
    %v1049 = vld [vmem:[%s6] sm:$0x1]
    %v1051 = vlaneseq
    %v1052 = vshrl.u32 %v1051, 7
    %v1053 = vsub.s32 0, %v1052
    %v1054 = vrot.slane %v1049, %v1053
    %v1056 = vadd.f32 %v1017, %v1054
    %v1057 = vadd.f32 %v1018, %v1054
    %v1058 = vadd.f32 %v1019, %v1054
    %v1059 = vadd.f32 %v1020, %v1054
    %v1060 = vadd.f32 %v1021, %v1054
    %v1061 = vadd.f32 %v1022, %v1054
    %v1062 = vadd.f32 %v1023, %v1054
    %v1063 = vadd.f32 %v1024, %v1054
    %v1064 = vadd.f32 %v1025, %v1054
    %v1065 = vadd.f32 %v1026, %v1054
    %v1066 = vadd.f32 %v1027, %v1054
    %v1067 = vadd.f32 %v1028, %v1054
    %v1068 = vadd.f32 %v1029, %v1054
    %v1069 = vadd.f32 %v1030, %v1054
    %v1070 = vadd.f32 %v1031, %v1054
    %v1071 = vadd.f32 %v1032, %v1054
    %v1072 = vadd.f32 %v1033, %v1054
    %v1073 = vadd.f32 %v1034, %v1054
    %v1074 = vadd.f32 %v1035, %v1054
    %v1075 = vadd.f32 %v1036, %v1054
    %v1076 = vadd.f32 %v1037, %v1054
    %v1077 = vadd.f32 %v1038, %v1054
    %v1078 = vadd.f32 %v1039, %v1054
    %v1079 = vadd.f32 %v1040, %v1054
    %v1080 = vadd.f32 %v1041, %v1054
    %v1081 = vadd.f32 %v1042, %v1054
    %v1082 = vadd.f32 %v1043, %v1054
    %v1083 = vadd.f32 %v1044, %v1054
    %v1084 = vadd.f32 %v1045, %v1054
    %v1085 = vadd.f32 %v1046, %v1054
    %v1086 = vadd.f32 %v1047, %v1054
    %v1087 = vadd.f32 %v1048, %v1054
    %1088 = vst [vmem:[#allocation5] sm:$0xff] %v1056
    %1089 = vst [vmem:[#allocation5 + $0x8] sm:$0xff] %v1057
    %1090 = vst [vmem:[#allocation5 + $0x10] sm:$0xff] %v1058
    %1091 = vst [vmem:[#allocation5 + $0x18] sm:$0xff] %v1059
    %1092 = vst [vmem:[#allocation5 + $0x20] sm:$0xff] %v1060
    %1093 = vst [vmem:[#allocation5 + $0x28] sm:$0xff] %v1061
    %1094 = vst [vmem:[#allocation5 + $0x30] sm:$0xff] %v1062
    %1095 = vst [vmem:[#allocation5 + $0x38] sm:$0xff] %v1063
    %1096 = vst [vmem:[#allocation5 + $0x40] sm:$0xff] %v1064
    %1097 = vst [vmem:[#allocation5 + $0x48] sm:$0xff] %v1065
    %1098 = vst [vmem:[#allocation5 + $0x50] sm:$0xff] %v1066
    %1099 = vst [vmem:[#allocation5 + $0x58] sm:$0xff] %v1067
    %1100 = vst [vmem:[#allocation5 + $0x60] sm:$0xff] %v1068
    %1101 = vst [vmem:[#allocation5 + $0x68] sm:$0xff] %v1069
    %1102 = vst [vmem:[#allocation5 + $0x70] sm:$0xff] %v1070
    %1103 = vst [vmem:[#allocation5 + $0x78] sm:$0xff] %v1071
    %1104 = vst [vmem:[#allocation5 + $0x80] sm:$0xff] %v1072
    %1105 = vst [vmem:[#allocation5 + $0x88] sm:$0xff] %v1073
    %1106 = vst [vmem:[#allocation5 + $0x90] sm:$0xff] %v1074
    %1107 = vst [vmem:[#allocation5 + $0x98] sm:$0xff] %v1075
    %1108 = vst [vmem:[#allocation5 + $0xa0] sm:$0xff] %v1076
    %1109 = vst [vmem:[#allocation5 + $0xa8] sm:$0xff] %v1077
    %1110 = vst [vmem:[#allocation5 + $0xb0] sm:$0xff] %v1078
    %1111 = vst [vmem:[#allocation5 + $0xb8] sm:$0xff] %v1079
    %1112 = vst [vmem:[#allocation5 + $0xc0] sm:$0xff] %v1080
    %1113 = vst [vmem:[#allocation5 + $0xc8] sm:$0xff] %v1081
    %1114 = vst [vmem:[#allocation5 + $0xd0] sm:$0xff] %v1082
    %1115 = vst [vmem:[#allocation5 + $0xd8] sm:$0xff] %v1083
    %1116 = vst [vmem:[#allocation5 + $0xe0] sm:$0xff] %v1084
    %1117 = vst [vmem:[#allocation5 + $0xe8] sm:$0xff] %v1085
    %1118 = vst [vmem:[#allocation5 + $0xf0] sm:$0xff] %v1086
    %1119 = vst [vmem:[#allocation5 + $0xf8] sm:$0xff] %v1087
    // Predicated region
    $region34: #{tpu_custom_call.1} parent=1 // pred_check
      _
    $region35: #{tpu_custom_call.1} parent=1 // pred_check_branch
      %1121 = sbr.rel (0) target = $region37
    $region36: #{tpu_custom_call.1} parent=1 // pred_region
      %s1123 = ssub.s32 4096, 256
      %1124 = vsyncadd [#allocation4], %s1123
      %s1125 = sshll.u32 [#allocation5], 4
      %s1126 = int_to_ptr.vmem [resolvable:$true] %s1125
      %1131 = dma.vmem_to_hbm [thread:$0]  %s1126, 256, %s7, [#allocation4], 128, 128, 8
    $region37: #{tpu_custom_call.1} parent=1 // pred_fallthru
      _
    // Predicated region
    $region38: #{tpu_custom_call.1} parent=1 // pred_check
      _
    $region39: #{tpu_custom_call.1} parent=1 // pred_check_branch
      %1133 = sbr.rel (0) target = $region41
    $region40: #{tpu_custom_call.1} parent=1 // pred_region
      %1134 = dma.done [#allocation4], 4096
    $region41: #{tpu_custom_call.1} parent=1 // pred_fallthru
      _
    %1135 = vsyncpa [#allocation3], 1
    %1136 = vsyncpa [#allocation4], 1

// kernel: tpu_custom_call.1
$region0: #{tpu_custom_call.1}
  #allocation0 [shape = 'u32[]', space=smem, size = 0x4, offset = 0x4, fixed_abs, tag = 'smem constant byte address 0x4 - core index']
  #allocation1 [shape = 'u32[144,128]{1,0:T(1,128)}', space=vmem, size = 0x12000, scoped, tag = 'internal scratch']
  %s0 = inlined_call_operand.vmem [shape: f32[16,1], index: 0, kind: input, shape index: {}]
  %s1 = inlined_call_operand.vmem [shape: f32[1,128], index: 1, kind: input, shape index: {}]
  %s2 = inlined_call_operand.vmem [shape: f32[1,128], index: 2, kind: input, shape index: {}]
  %s3 = inlined_call_operand.hbm [shape: f32[128,128], index: 3, kind: input, shape index: {}]
  %s4 = inlined_call_operand.vmem [shape: f32[1,128], index: 4, kind: input, shape index: {}]
  %s5 = inlined_call_operand.vmem [shape: f32[1,128], index: 5, kind: input, shape index: {}]
  %s6 = inlined_call_operand.vmem [shape: f32[1,128], index: 6, kind: input, shape index: {}]
  %s7 = inlined_call_operand.hbm [shape: f32[16,128], index: 7, kind: output, shape index: {}]
  %s8 = sld [smem:[#allocation0]]
  $region42: #{tpu_custom_call.1} parent=0
    _
  %s10 = ssub.s32 1, %s8
  %s11 = scalar_select 0, %s10, %s8
  $region1: #{tpu_custom_call.1} parent=0
    #allocation2 [shape = 'u8[65536]{0}', space=vmem, size = 0x10000, scoped, tag = 'input window, operand 3, single buffered']
    #allocation3 [shape = 's32[1]{0}', space=sflag, size = 0x4, scoped, tag = 'scoped memory for tpu_custom_call.1']
    #allocation4 [shape = 's32[1]{0}', space=sflag, size = 0x4, scoped, tag = 'scoped memory for tpu_custom_call.1']
    #allocation5 [shape = 'u8[131072]{0}', space=vmem, size = 0x20000, scoped, tag = 'output window, operand 0, single buffered']
    %12 = vsyncpa [#allocation3], 0
    %13 = vsyncpa [#allocation4], 0
    // Predicated region
    $region2: #{tpu_custom_call.1} parent=1 // pred_check
      _
    $region3: #{tpu_custom_call.1} parent=1 // pred_check_branch
      %15 = sbr.rel (0) target = $region5
    $region4: #{tpu_custom_call.1} parent=1 // pred_region
      _
    $region5: #{tpu_custom_call.1} parent=1 // pred_fallthru
      _
    // Predicated region
    $region6: #{tpu_custom_call.1} parent=1 // pred_check
      _
    $region7: #{tpu_custom_call.1} parent=1 // pred_check_branch
      %17 = sbr.rel (0) target = $region9
    $region8: #{tpu_custom_call.1} parent=1 // pred_region
      _
    $region9: #{tpu_custom_call.1} parent=1 // pred_fallthru
      _
    // Predicated region
    $region10: #{tpu_custom_call.1} parent=1 // pred_check
      _
    $region11: #{tpu_custom_call.1} parent=1 // pred_check_branch
      %19 = sbr.rel (0) target = $region13
    $region12: #{tpu_custom_call.1} parent=1 // pred_region
      _
    $region13: #{tpu_custom_call.1} parent=1 // pred_fallthru
      _
    // Predicated region
    $region14: #{tpu_custom_call.1} parent=1 // pred_check
      _
    $region15: #{tpu_custom_call.1} parent=1 // pred_check_branch
      %21 = sbr.rel (0) target = $region17
    $region16: #{tpu_custom_call.1} parent=1 // pred_region
      %s23 = ssub.s32 2048, 2048
      %24 = vsyncadd [#allocation3], %s23
      %s25 = sshll.u32 [#allocation2], 4
      %s26 = int_to_ptr.vmem [resolvable:$true] %s25
      %31 = dma.hbm_to_vmem [thread:$0]  %s3, 2048, %s26, [#allocation3], 128, 128, 8
    $region17: #{tpu_custom_call.1} parent=1 // pred_fallthru
      _
    // Predicated region
    $region18: #{tpu_custom_call.1} parent=1 // pred_check
      _
    $region19: #{tpu_custom_call.1} parent=1 // pred_check_branch
      %33 = sbr.rel (0) target = $region21
    $region20: #{tpu_custom_call.1} parent=1 // pred_region
      _
    $region21: #{tpu_custom_call.1} parent=1 // pred_fallthru
      _
    // Predicated region
    $region22: #{tpu_custom_call.1} parent=1 // pred_check
      _
    $region23: #{tpu_custom_call.1} parent=1 // pred_check_branch
      %35 = sbr.rel (0) target = $region25
    $region24: #{tpu_custom_call.1} parent=1 // pred_region
      _
    $region25: #{tpu_custom_call.1} parent=1 // pred_fallthru
      _
    // Predicated region
    $region26: #{tpu_custom_call.1} parent=1 // pred_check
      _
    $region27: #{tpu_custom_call.1} parent=1 // pred_check_branch
      %37 = sbr.rel (0) target = $region29
    $region28: #{tpu_custom_call.1} parent=1 // pred_region
      _
    $region29: #{tpu_custom_call.1} parent=1 // pred_fallthru
      _
    // Predicated region
    $region30: #{tpu_custom_call.1} parent=1 // pred_check
      _
    $region31: #{tpu_custom_call.1} parent=1 // pred_check_branch
      %39 = sbr.rel (0) target = $region33
    $region32: #{tpu_custom_call.1} parent=1 // pred_region
      %40 = dma.done [#allocation3], 2048
    $region33: #{tpu_custom_call.1} parent=1 // pred_fallthru
      _
    %v41 = vld [vmem:[%s0] sm:$0xff]
    %v42 = vld [vmem:[%s0 + $0x8] sm:$0xff]
    %v43 = vld [vmem:[%s0 + $0x10] sm:$0xff]
    %v44 = vld [vmem:[%s0 + $0x18] sm:$0xff]
    %v45 = vld [vmem:[%s0 + $0x20] sm:$0xff]
    %v46 = vld [vmem:[%s0 + $0x28] sm:$0xff]
    %v47 = vld [vmem:[%s0 + $0x30] sm:$0xff]
    %v48 = vld [vmem:[%s0 + $0x38] sm:$0xff]
    %v49 = vld [vmem:[%s0 + $0x40] sm:$0xff]
    %v50 = vld [vmem:[%s0 + $0x48] sm:$0xff]
    %v51 = vld [vmem:[%s0 + $0x50] sm:$0xff]
    %v52 = vld [vmem:[%s0 + $0x58] sm:$0xff]
    %v53 = vld [vmem:[%s0 + $0x60] sm:$0xff]
    %v54 = vld [vmem:[%s0 + $0x68] sm:$0xff]
    %v55 = vld [vmem:[%s0 + $0x70] sm:$0xff]
    %v56 = vld [vmem:[%s0 + $0x78] sm:$0xff]
    %v57 = vld [vmem:[%s0 + $0x80] sm:$0xff]
    %v58 = vld [vmem:[%s0 + $0x88] sm:$0xff]
    %v59 = vld [vmem:[%s0 + $0x90] sm:$0xff]
    %v60 = vld [vmem:[%s0 + $0x98] sm:$0xff]
    %v61 = vld [vmem:[%s0 + $0xa0] sm:$0xff]
    %v62 = vld [vmem:[%s0 + $0xa8] sm:$0xff]
    %v63 = vld [vmem:[%s0 + $0xb0] sm:$0xff]
    %v64 = vld [vmem:[%s0 + $0xb8] sm:$0xff]
    %v65 = vld [vmem:[%s0 + $0xc0] sm:$0xff]
    %v66 = vld [vmem:[%s0 + $0xc8] sm:$0xff]
    %v67 = vld [vmem:[%s0 + $0xd0] sm:$0xff]
    %v68 = vld [vmem:[%s0 + $0xd8] sm:$0xff]
    %v69 = vld [vmem:[%s0 + $0xe0] sm:$0xff]
    %v70 = vld [vmem:[%s0 + $0xe8] sm:$0xff]
    %v71 = vld [vmem:[%s0 + $0xf0] sm:$0xff]
    %v72 = vld [vmem:[%s0 + $0xf8] sm:$0xff]
    %v73 = vmin.f32 %v41, 10.0
    %v74 = vmin.f32 %v42, 10.0
    %v75 = vmin.f32 %v43, 10.0
    %v76 = vmin.f32 %v44, 10.0
    %v77 = vmin.f32 %v45, 10.0
    %v78 = vmin.f32 %v46, 10.0
    %v79 = vmin.f32 %v47, 10.0
    %v80 = vmin.f32 %v48, 10.0
    %v81 = vmin.f32 %v49, 10.0
    %v82 = vmin.f32 %v50, 10.0
    %v83 = vmin.f32 %v51, 10.0
    %v84 = vmin.f32 %v52, 10.0
    %v85 = vmin.f32 %v53, 10.0
    %v86 = vmin.f32 %v54, 10.0
    %v87 = vmin.f32 %v55, 10.0
    %v88 = vmin.f32 %v56, 10.0
    %v89 = vmin.f32 %v57, 10.0
    %v90 = vmin.f32 %v58, 10.0
    %v91 = vmin.f32 %v59, 10.0
    %v92 = vmin.f32 %v60, 10.0
    %v93 = vmin.f32 %v61, 10.0
    %v94 = vmin.f32 %v62, 10.0
    %v95 = vmin.f32 %v63, 10.0
    %v96 = vmin.f32 %v64, 10.0
    %v97 = vmin.f32 %v65, 10.0
    %v98 = vmin.f32 %v66, 10.0
    %v99 = vmin.f32 %v67, 10.0
    %v100 = vmin.f32 %v68, 10.0
    %v101 = vmin.f32 %v69, 10.0
    %v102 = vmin.f32 %v70, 10.0
    %v103 = vmin.f32 %v71, 10.0
    %v104 = vmin.f32 %v72, 10.0
    %v105 = vld [vmem:[%s1] sm:$0x1]
    %107 = vset.pattern.permute.xlu0 0
    %108 = vperm.xlu0 %107, %v73
    %v109 = vpop.permute.xlu0 %108
    %112 = vset.pattern.permute.xlu0 0
    %113 = vperm.xlu0 %112, %v74
    %v114 = vpop.permute.xlu0 %113
    %117 = vset.pattern.permute.xlu0 0
    %118 = vperm.xlu0 %117, %v75
    %v119 = vpop.permute.xlu0 %118
    %122 = vset.pattern.permute.xlu0 0
    %123 = vperm.xlu0 %122, %v76
    %v124 = vpop.permute.xlu0 %123
    %127 = vset.pattern.permute.xlu0 0
    %128 = vperm.xlu0 %127, %v77
    %v129 = vpop.permute.xlu0 %128
    %132 = vset.pattern.permute.xlu0 0
    %133 = vperm.xlu0 %132, %v78
    %v134 = vpop.permute.xlu0 %133
    %137 = vset.pattern.permute.xlu0 0
    %138 = vperm.xlu0 %137, %v79
    %v139 = vpop.permute.xlu0 %138
    %142 = vset.pattern.permute.xlu0 0
    %143 = vperm.xlu0 %142, %v80
    %v144 = vpop.permute.xlu0 %143
    %147 = vset.pattern.permute.xlu0 0
    %148 = vperm.xlu0 %147, %v81
    %v149 = vpop.permute.xlu0 %148
    %152 = vset.pattern.permute.xlu0 0
    %153 = vperm.xlu0 %152, %v82
    %v154 = vpop.permute.xlu0 %153
    %157 = vset.pattern.permute.xlu0 0
    %158 = vperm.xlu0 %157, %v83
    %v159 = vpop.permute.xlu0 %158
    %162 = vset.pattern.permute.xlu0 0
    %163 = vperm.xlu0 %162, %v84
    %v164 = vpop.permute.xlu0 %163
    %167 = vset.pattern.permute.xlu0 0
    %168 = vperm.xlu0 %167, %v85
    %v169 = vpop.permute.xlu0 %168
    %172 = vset.pattern.permute.xlu0 0
    %173 = vperm.xlu0 %172, %v86
    %v174 = vpop.permute.xlu0 %173
    %177 = vset.pattern.permute.xlu0 0
    %178 = vperm.xlu0 %177, %v87
    %v179 = vpop.permute.xlu0 %178
    %182 = vset.pattern.permute.xlu0 0
    %183 = vperm.xlu0 %182, %v88
    %v184 = vpop.permute.xlu0 %183
    %187 = vset.pattern.permute.xlu0 0
    %188 = vperm.xlu0 %187, %v89
    %v189 = vpop.permute.xlu0 %188
    %192 = vset.pattern.permute.xlu0 0
    %193 = vperm.xlu0 %192, %v90
    %v194 = vpop.permute.xlu0 %193
    %197 = vset.pattern.permute.xlu0 0
    %198 = vperm.xlu0 %197, %v91
    %v199 = vpop.permute.xlu0 %198
    %202 = vset.pattern.permute.xlu0 0
    %203 = vperm.xlu0 %202, %v92
    %v204 = vpop.permute.xlu0 %203
    %207 = vset.pattern.permute.xlu0 0
    %208 = vperm.xlu0 %207, %v93
    %v209 = vpop.permute.xlu0 %208
    %212 = vset.pattern.permute.xlu0 0
    %213 = vperm.xlu0 %212, %v94
    %v214 = vpop.permute.xlu0 %213
    %217 = vset.pattern.permute.xlu0 0
    %218 = vperm.xlu0 %217, %v95
    %v219 = vpop.permute.xlu0 %218
    %222 = vset.pattern.permute.xlu0 0
    %223 = vperm.xlu0 %222, %v96
    %v224 = vpop.permute.xlu0 %223
    %227 = vset.pattern.permute.xlu0 0
    %228 = vperm.xlu0 %227, %v97
    %v229 = vpop.permute.xlu0 %228
    %232 = vset.pattern.permute.xlu0 0
    %233 = vperm.xlu0 %232, %v98
    %v234 = vpop.permute.xlu0 %233
    %237 = vset.pattern.permute.xlu0 0
    %238 = vperm.xlu0 %237, %v99
    %v239 = vpop.permute.xlu0 %238
    %242 = vset.pattern.permute.xlu0 0
    %243 = vperm.xlu0 %242, %v100
    %v244 = vpop.permute.xlu0 %243
    %247 = vset.pattern.permute.xlu0 0
    %248 = vperm.xlu0 %247, %v101
    %v249 = vpop.permute.xlu0 %248
    %252 = vset.pattern.permute.xlu0 0
    %253 = vperm.xlu0 %252, %v102
    %v254 = vpop.permute.xlu0 %253
    %257 = vset.pattern.permute.xlu0 0
    %258 = vperm.xlu0 %257, %v103
    %v259 = vpop.permute.xlu0 %258
    %262 = vset.pattern.permute.xlu0 0
    %263 = vperm.xlu0 %262, %v104
    %v264 = vpop.permute.xlu0 %263
    %v267 = vlaneseq
    %v268 = vshrl.u32 %v267, 7
    %v269 = vsub.s32 0, %v268
    %v270 = vrot.slane %v105, %v269
    %v272 = vmul.f32 %v109, %v270
    %v273 = vmul.f32 %v114, %v270
    %v274 = vmul.f32 %v119, %v270
    %v275 = vmul.f32 %v124, %v270
    %v276 = vmul.f32 %v129, %v270
    %v277 = vmul.f32 %v134, %v270
    %v278 = vmul.f32 %v139, %v270
    %v279 = vmul.f32 %v144, %v270
    %v280 = vmul.f32 %v149, %v270
    %v281 = vmul.f32 %v154, %v270
    %v282 = vmul.f32 %v159, %v270
    %v283 = vmul.f32 %v164, %v270
    %v284 = vmul.f32 %v169, %v270
    %v285 = vmul.f32 %v174, %v270
    %v286 = vmul.f32 %v179, %v270
    %v287 = vmul.f32 %v184, %v270
    %v288 = vmul.f32 %v189, %v270
    %v289 = vmul.f32 %v194, %v270
    %v290 = vmul.f32 %v199, %v270
    %v291 = vmul.f32 %v204, %v270
    %v292 = vmul.f32 %v209, %v270
    %v293 = vmul.f32 %v214, %v270
    %v294 = vmul.f32 %v219, %v270
    %v295 = vmul.f32 %v224, %v270
    %v296 = vmul.f32 %v229, %v270
    %v297 = vmul.f32 %v234, %v270
    %v298 = vmul.f32 %v239, %v270
    %v299 = vmul.f32 %v244, %v270
    %v300 = vmul.f32 %v249, %v270
    %v301 = vmul.f32 %v254, %v270
    %v302 = vmul.f32 %v259, %v270
    %v303 = vmul.f32 %v264, %v270
    %v304 = vld [vmem:[%s2] sm:$0x1]
    %v306 = vlaneseq
    %v307 = vshrl.u32 %v306, 7
    %v308 = vsub.s32 0, %v307
    %v309 = vrot.slane %v304, %v308
    %v311 = vadd.f32 %v272, %v309
    %v312 = vadd.f32 %v273, %v309
    %v313 = vadd.f32 %v274, %v309
    %v314 = vadd.f32 %v275, %v309
    %v315 = vadd.f32 %v276, %v309
    %v316 = vadd.f32 %v277, %v309
    %v317 = vadd.f32 %v278, %v309
    %v318 = vadd.f32 %v279, %v309
    %v319 = vadd.f32 %v280, %v309
    %v320 = vadd.f32 %v281, %v309
    %v321 = vadd.f32 %v282, %v309
    %v322 = vadd.f32 %v283, %v309
    %v323 = vadd.f32 %v284, %v309
    %v324 = vadd.f32 %v285, %v309
    %v325 = vadd.f32 %v286, %v309
    %v326 = vadd.f32 %v287, %v309
    %v327 = vadd.f32 %v288, %v309
    %v328 = vadd.f32 %v289, %v309
    %v329 = vadd.f32 %v290, %v309
    %v330 = vadd.f32 %v291, %v309
    %v331 = vadd.f32 %v292, %v309
    %v332 = vadd.f32 %v293, %v309
    %v333 = vadd.f32 %v294, %v309
    %v334 = vadd.f32 %v295, %v309
    %v335 = vadd.f32 %v296, %v309
    %v336 = vadd.f32 %v297, %v309
    %v337 = vadd.f32 %v298, %v309
    %v338 = vadd.f32 %v299, %v309
    %v339 = vadd.f32 %v300, %v309
    %v340 = vadd.f32 %v301, %v309
    %v341 = vadd.f32 %v302, %v309
    %v342 = vadd.f32 %v303, %v309
    %v343 = vmax.f32 %v311, 0.0
    %v344 = vmax.f32 %v312, 0.0
    %v345 = vmax.f32 %v313, 0.0
    %v346 = vmax.f32 %v314, 0.0
    %v347 = vmax.f32 %v315, 0.0
    %v348 = vmax.f32 %v316, 0.0
    %v349 = vmax.f32 %v317, 0.0
    %v350 = vmax.f32 %v318, 0.0
    %v351 = vmax.f32 %v319, 0.0
    %v352 = vmax.f32 %v320, 0.0
    %v353 = vmax.f32 %v321, 0.0
    %v354 = vmax.f32 %v322, 0.0
    %v355 = vmax.f32 %v323, 0.0
    %v356 = vmax.f32 %v324, 0.0
    %v357 = vmax.f32 %v325, 0.0
    %v358 = vmax.f32 %v326, 0.0
    %v359 = vmax.f32 %v327, 0.0
    %v360 = vmax.f32 %v328, 0.0
    %v361 = vmax.f32 %v329, 0.0
    %v362 = vmax.f32 %v330, 0.0
    %v363 = vmax.f32 %v331, 0.0
    %v364 = vmax.f32 %v332, 0.0
    %v365 = vmax.f32 %v333, 0.0
    %v366 = vmax.f32 %v334, 0.0
    %v367 = vmax.f32 %v335, 0.0
    %v368 = vmax.f32 %v336, 0.0
    %v369 = vmax.f32 %v337, 0.0
    %v370 = vmax.f32 %v338, 0.0
    %v371 = vmax.f32 %v339, 0.0
    %v372 = vmax.f32 %v340, 0.0
    %v373 = vmax.f32 %v341, 0.0
    %v374 = vmax.f32 %v342, 0.0
    %v375 = vld [vmem:[#allocation2] sm:$0xff]
    %v376 = vld [vmem:[#allocation2 + $0x8] sm:$0xff]
    %v377 = vld [vmem:[#allocation2 + $0x10] sm:$0xff]
    %v378 = vld [vmem:[#allocation2 + $0x18] sm:$0xff]
    %v379 = vld [vmem:[#allocation2 + $0x20] sm:$0xff]
    %v380 = vld [vmem:[#allocation2 + $0x28] sm:$0xff]
    %v381 = vld [vmem:[#allocation2 + $0x30] sm:$0xff]
    %v382 = vld [vmem:[#allocation2 + $0x38] sm:$0xff]
    %v383 = vld [vmem:[#allocation2 + $0x40] sm:$0xff]
    %v384 = vld [vmem:[#allocation2 + $0x48] sm:$0xff]
    %v385 = vld [vmem:[#allocation2 + $0x50] sm:$0xff]
    %v386 = vld [vmem:[#allocation2 + $0x58] sm:$0xff]
    %v387 = vld [vmem:[#allocation2 + $0x60] sm:$0xff]
    %v388 = vld [vmem:[#allocation2 + $0x68] sm:$0xff]
    %v389 = vld [vmem:[#allocation2 + $0x70] sm:$0xff]
    %v390 = vld [vmem:[#allocation2 + $0x78] sm:$0xff]
    %v391 = vld [vmem:[%s4] sm:$0x1]
    %v393 = vlaneseq
    %v394 = vshrl.u32 %v393, 7
    %v395 = vsub.s32 0, %v394
    %v396 = vrot.slane %v391, %v395
    %398 = vmatprep.subr.mxu0 0.0
    %399 = vmatpush1.msra.mxu0 %v375
    %400 = vmatprep.subr.mxu0 0.0
    %401 = vmatpush1.msra.mxu0 %v376
    %402 = vmatprep.subr.mxu0 0.0
    %403 = vmatpush1.msra.mxu0 %v377
    %404 = vmatprep.subr.mxu0 0.0
    %405 = vmatpush1.msra.mxu0 %v378
    %406 = vmatprep.subr.mxu0 0.0
    %407 = vmatpush1.msra.mxu0 %v379
    %408 = vmatprep.subr.mxu0 0.0
    %409 = vmatpush1.msra.mxu0 %v380
    %410 = vmatprep.subr.mxu0 0.0
    %411 = vmatpush1.msra.mxu0 %v381
    %412 = vmatprep.subr.mxu0 0.0
    %413 = vmatpush1.msra.mxu0 %v382
    %414 = vmatprep.subr.mxu0 0.0
    %415 = vmatpush1.msra.mxu0 %v383
    %416 = vmatprep.subr.mxu0 0.0
    %417 = vmatpush1.msra.mxu0 %v384
    %418 = vmatprep.subr.mxu0 0.0
    %419 = vmatpush1.msra.mxu0 %v385
    %420 = vmatprep.subr.mxu0 0.0
    %421 = vmatpush1.msra.mxu0 %v386
    %422 = vmatprep.subr.mxu0 0.0
    %423 = vmatpush1.msra.mxu0 %v387
    %424 = vmatprep.subr.mxu0 0.0
    %425 = vmatpush1.msra.mxu0 %v388
    %426 = vmatprep.subr.mxu0 0.0
    %427 = vmatpush1.msra.mxu0 %v389
    %428 = vmatprep.subr.mxu0 0.0
    %429 = vmatpush1.msra.mxu0 %v390
    %430 = vmatprep.subr.mxu0 0.0
    %431 = vmatpush1.msra.mxu0 0.0
    %432 = vmatprep.subr.mxu0 0.0
    %433 = vmatpush1.msra.mxu0 0.0
    %434 = vmatprep.subr.mxu0 0.0
    %435 = vmatpush1.msra.mxu0 0.0
    %436 = vmatprep.subr.mxu0 0.0
    %437 = vmatpush1.msra.mxu0 0.0
    %438 = vmatprep.subr.mxu0 0.0
    %439 = vmatpush1.msra.mxu0 0.0
    %440 = vmatprep.subr.mxu0 0.0
    %441 = vmatpush1.msra.mxu0 0.0
    %442 = vmatprep.subr.mxu0 0.0
    %443 = vmatpush1.msra.mxu0 0.0
    %444 = vmatprep.subr.mxu0 0.0
    %445 = vmatpush1.msra.mxu0 0.0
    %446 = vmatprep.subr.mxu0 0.0
    %447 = vmatpush1.msra.mxu0 0.0
    %448 = vmatprep.subr.mxu0 0.0
    %449 = vmatpush1.msra.mxu0 0.0
    %450 = vmatprep.subr.mxu0 0.0
    %451 = vmatpush1.msra.mxu0 0.0
    %452 = vmatprep.subr.mxu0 0.0
    %453 = vmatpush1.msra.mxu0 0.0
    %454 = vmatprep.subr.mxu0 0.0
    %455 = vmatpush1.msra.mxu0 0.0
    %456 = vmatprep.subr.mxu0 0.0
    %457 = vmatpush1.msra.mxu0 0.0
    %458 = vmatprep.subr.mxu0 0.0
    %459 = vmatpush1.msra.mxu0 0.0
    %460 = vmatprep.subr.mxu0 0.0
    %461 = vmatpush1.msra.mxu0 0.0
    %462 = vmatprep.mubr.f32.mxu0 0.0
    %463 = vmatmul.mubr.f32.gmra.mrb[0].mxu0 %v343
    %v464 = vpop.f32.mrb[0].mxu0
    %v465 = vadd.f32 %v396, %v464
    %v466 = vpop.f32.mrb[0].mxu0
    %467 = vmatprep.mubr.f32.mxu0 0.0
    %468 = vmatmul.mubr.f32.gmra.mrb[0].mxu0 %v344
    %v469 = vpop.f32.mrb[0].mxu0
    %v470 = vadd.f32 %v396, %v469
    %v471 = vpop.f32.mrb[0].mxu0
    %472 = vmatprep.mubr.f32.mxu0 0.0
    %473 = vmatmul.mubr.f32.gmra.mrb[0].mxu0 %v345
    %v474 = vpop.f32.mrb[0].mxu0
    %v475 = vadd.f32 %v396, %v474
    %v476 = vpop.f32.mrb[0].mxu0
    %477 = vmatprep.mubr.f32.mxu0 0.0
    %478 = vmatmul.mubr.f32.gmra.mrb[0].mxu0 %v346
    %v479 = vpop.f32.mrb[0].mxu0
    %v480 = vadd.f32 %v396, %v479
    %v481 = vpop.f32.mrb[0].mxu0
    %482 = vmatprep.mubr.f32.mxu0 0.0
    %483 = vmatmul.mubr.f32.gmra.mrb[0].mxu0 %v347
    %v484 = vpop.f32.mrb[0].mxu0
    %v485 = vadd.f32 %v396, %v484
    %v486 = vpop.f32.mrb[0].mxu0
    %487 = vmatprep.mubr.f32.mxu0 0.0
    %488 = vmatmul.mubr.f32.gmra.mrb[0].mxu0 %v348
    %v489 = vpop.f32.mrb[0].mxu0
    %v490 = vadd.f32 %v396, %v489
    %v491 = vpop.f32.mrb[0].mxu0
    %492 = vmatprep.mubr.f32.mxu0 0.0
    %493 = vmatmul.mubr.f32.gmra.mrb[0].mxu0 %v349
    %v494 = vpop.f32.mrb[0].mxu0
    %v495 = vadd.f32 %v396, %v494
    %v496 = vpop.f32.mrb[0].mxu0
    %497 = vmatprep.mubr.f32.mxu0 0.0
    %498 = vmatmul.mubr.f32.gmra.mrb[0].mxu0 %v350
    %v499 = vpop.f32.mrb[0].mxu0
    %v500 = vadd.f32 %v396, %v499
    %v501 = vpop.f32.mrb[0].mxu0
    %502 = vmatprep.mubr.f32.mxu0 0.0
    %503 = vmatmul.mubr.f32.gmra.mrb[0].mxu0 %v351
    %v504 = vpop.f32.mrb[0].mxu0
    %v505 = vadd.f32 %v396, %v504
    %v506 = vpop.f32.mrb[0].mxu0
    %507 = vmatprep.mubr.f32.mxu0 0.0
    %508 = vmatmul.mubr.f32.gmra.mrb[0].mxu0 %v352
    %v509 = vpop.f32.mrb[0].mxu0
    %v510 = vadd.f32 %v396, %v509
    %v511 = vpop.f32.mrb[0].mxu0
    %512 = vmatprep.mubr.f32.mxu0 0.0
    %513 = vmatmul.mubr.f32.gmra.mrb[0].mxu0 %v353
    %v514 = vpop.f32.mrb[0].mxu0
    %v515 = vadd.f32 %v396, %v514
    %v516 = vpop.f32.mrb[0].mxu0
    %517 = vmatprep.mubr.f32.mxu0 0.0
    %518 = vmatmul.mubr.f32.gmra.mrb[0].mxu0 %v354
    %v519 = vpop.f32.mrb[0].mxu0
    %v520 = vadd.f32 %v396, %v519
    %v521 = vpop.f32.mrb[0].mxu0
    %522 = vmatprep.mubr.f32.mxu0 0.0
    %523 = vmatmul.mubr.f32.gmra.mrb[0].mxu0 %v355
    %v524 = vpop.f32.mrb[0].mxu0
    %v525 = vadd.f32 %v396, %v524
    %v526 = vpop.f32.mrb[0].mxu0
    %527 = vmatprep.mubr.f32.mxu0 0.0
    %528 = vmatmul.mubr.f32.gmra.mrb[0].mxu0 %v356
    %v529 = vpop.f32.mrb[0].mxu0
    %v530 = vadd.f32 %v396, %v529
    %v531 = vpop.f32.mrb[0].mxu0
    %532 = vmatprep.mubr.f32.mxu0 0.0
    %533 = vmatmul.mubr.f32.gmra.mrb[0].mxu0 %v357
    %v534 = vpop.f32.mrb[0].mxu0
    %v535 = vadd.f32 %v396, %v534
    %v536 = vpop.f32.mrb[0].mxu0
    %537 = vmatprep.mubr.f32.mxu0 0.0
    %538 = vmatmul.mubr.f32.gmra.mrb[0].mxu0 %v358
    %v539 = vpop.f32.mrb[0].mxu0
    %v540 = vadd.f32 %v396, %v539
    %v541 = vpop.f32.mrb[0].mxu0
    %542 = vmatprep.mubr.f32.mxu0 0.0
    %543 = vmatmul.mubr.f32.gmra.mrb[0].mxu0 %v359
    %v544 = vpop.f32.mrb[0].mxu0
    %v545 = vadd.f32 %v396, %v544
    %v546 = vpop.f32.mrb[0].mxu0
    %547 = vmatprep.mubr.f32.mxu0 0.0
    %548 = vmatmul.mubr.f32.gmra.mrb[0].mxu0 %v360
    %v549 = vpop.f32.mrb[0].mxu0
    %v550 = vadd.f32 %v396, %v549
    %v551 = vpop.f32.mrb[0].mxu0
    %552 = vmatprep.mubr.f32.mxu0 0.0
    %553 = vmatmul.mubr.f32.gmra.mrb[0].mxu0 %v361
    %v554 = vpop.f32.mrb[0].mxu0
    %v555 = vadd.f32 %v396, %v554
    %v556 = vpop.f32.mrb[0].mxu0
    %557 = vmatprep.mubr.f32.mxu0 0.0
    %558 = vmatmul.mubr.f32.gmra.mrb[0].mxu0 %v362
    %v559 = vpop.f32.mrb[0].mxu0
    %v560 = vadd.f32 %v396, %v559
    %v561 = vpop.f32.mrb[0].mxu0
    %562 = vmatprep.mubr.f32.mxu0 0.0
    %563 = vmatmul.mubr.f32.gmra.mrb[0].mxu0 %v363
    %v564 = vpop.f32.mrb[0].mxu0
    %v565 = vadd.f32 %v396, %v564
    %v566 = vpop.f32.mrb[0].mxu0
    %567 = vmatprep.mubr.f32.mxu0 0.0
    %568 = vmatmul.mubr.f32.gmra.mrb[0].mxu0 %v364
    %v569 = vpop.f32.mrb[0].mxu0
    %v570 = vadd.f32 %v396, %v569
    %v571 = vpop.f32.mrb[0].mxu0
    %572 = vmatprep.mubr.f32.mxu0 0.0
    %573 = vmatmul.mubr.f32.gmra.mrb[0].mxu0 %v365
    %v574 = vpop.f32.mrb[0].mxu0
    %v575 = vadd.f32 %v396, %v574
    %v576 = vpop.f32.mrb[0].mxu0
    %577 = vmatprep.mubr.f32.mxu0 0.0
    %578 = vmatmul.mubr.f32.gmra.mrb[0].mxu0 %v366
    %v579 = vpop.f32.mrb[0].mxu0
    %v580 = vadd.f32 %v396, %v579
    %v581 = vpop.f32.mrb[0].mxu0
    %582 = vmatprep.mubr.f32.mxu0 0.0
    %583 = vmatmul.mubr.f32.gmra.mrb[0].mxu0 %v367
    %v584 = vpop.f32.mrb[0].mxu0
    %v585 = vadd.f32 %v396, %v584
    %v586 = vpop.f32.mrb[0].mxu0
    %587 = vmatprep.mubr.f32.mxu0 0.0
    %588 = vmatmul.mubr.f32.gmra.mrb[0].mxu0 %v368
    %v589 = vpop.f32.mrb[0].mxu0
    %v590 = vadd.f32 %v396, %v589
    %v591 = vpop.f32.mrb[0].mxu0
    %592 = vmatprep.mubr.f32.mxu0 0.0
    %593 = vmatmul.mubr.f32.gmra.mrb[0].mxu0 %v369
    %v594 = vpop.f32.mrb[0].mxu0
    %v595 = vadd.f32 %v396, %v594
    %v596 = vpop.f32.mrb[0].mxu0
    %597 = vmatprep.mubr.f32.mxu0 0.0
    %598 = vmatmul.mubr.f32.gmra.mrb[0].mxu0 %v370
    %v599 = vpop.f32.mrb[0].mxu0
    %v600 = vadd.f32 %v396, %v599
    %v601 = vpop.f32.mrb[0].mxu0
    %602 = vmatprep.mubr.f32.mxu0 0.0
    %603 = vmatmul.mubr.f32.gmra.mrb[0].mxu0 %v371
    %v604 = vpop.f32.mrb[0].mxu0
    %v605 = vadd.f32 %v396, %v604
    %v606 = vpop.f32.mrb[0].mxu0
    %607 = vmatprep.mubr.f32.mxu0 0.0
    %608 = vmatmul.mubr.f32.gmra.mrb[0].mxu0 %v372
    %v609 = vpop.f32.mrb[0].mxu0
    %v610 = vadd.f32 %v396, %v609
    %v611 = vpop.f32.mrb[0].mxu0
    %612 = vmatprep.mubr.f32.mxu0 0.0
    %613 = vmatmul.mubr.f32.gmra.mrb[0].mxu0 %v373
    %v614 = vpop.f32.mrb[0].mxu0
    %v615 = vadd.f32 %v396, %v614
    %v616 = vpop.f32.mrb[0].mxu0
    %617 = vmatprep.mubr.f32.mxu0 0.0
    %618 = vmatmul.mubr.f32.gmra.mrb[0].mxu0 %v374
    %v619 = vpop.f32.mrb[0].mxu0
    %v620 = vadd.f32 %v396, %v619
    %v621 = vpop.f32.mrb[0].mxu0
    %622 = vdwg.mxu0
    %623 = vadd.xlane.f32.xlu0 %v465
    %v624 = vpop.xlane.xlu0 %623
    %625 = vadd.xlane.f32.xlu0 %v470
    %v626 = vpop.xlane.xlu0 %625
    %627 = vadd.xlane.f32.xlu0 %v475
    %v628 = vpop.xlane.xlu0 %627
    %629 = vadd.xlane.f32.xlu0 %v480
    %v630 = vpop.xlane.xlu0 %629
    %631 = vadd.xlane.f32.xlu0 %v485
    %v632 = vpop.xlane.xlu0 %631
    %633 = vadd.xlane.f32.xlu0 %v490
    %v634 = vpop.xlane.xlu0 %633
    %635 = vadd.xlane.f32.xlu0 %v495
    %v636 = vpop.xlane.xlu0 %635
    %637 = vadd.xlane.f32.xlu0 %v500
    %v638 = vpop.xlane.xlu0 %637
    %639 = vadd.xlane.f32.xlu0 %v505
    %v640 = vpop.xlane.xlu0 %639
    %641 = vadd.xlane.f32.xlu0 %v510
    %v642 = vpop.xlane.xlu0 %641
    %643 = vadd.xlane.f32.xlu0 %v515
    %v644 = vpop.xlane.xlu0 %643
    %645 = vadd.xlane.f32.xlu0 %v520
    %v646 = vpop.xlane.xlu0 %645
    %647 = vadd.xlane.f32.xlu0 %v525
    %v648 = vpop.xlane.xlu0 %647
    %649 = vadd.xlane.f32.xlu0 %v530
    %v650 = vpop.xlane.xlu0 %649
    %651 = vadd.xlane.f32.xlu0 %v535
    %v652 = vpop.xlane.xlu0 %651
    %653 = vadd.xlane.f32.xlu0 %v540
    %v654 = vpop.xlane.xlu0 %653
    %655 = vadd.xlane.f32.xlu0 %v545
    %v656 = vpop.xlane.xlu0 %655
    %657 = vadd.xlane.f32.xlu0 %v550
    %v658 = vpop.xlane.xlu0 %657
    %659 = vadd.xlane.f32.xlu0 %v555
    %v660 = vpop.xlane.xlu0 %659
    %661 = vadd.xlane.f32.xlu0 %v560
    %v662 = vpop.xlane.xlu0 %661
    %663 = vadd.xlane.f32.xlu0 %v565
    %v664 = vpop.xlane.xlu0 %663
    %665 = vadd.xlane.f32.xlu0 %v570
    %v666 = vpop.xlane.xlu0 %665
    %667 = vadd.xlane.f32.xlu0 %v575
    %v668 = vpop.xlane.xlu0 %667
    %669 = vadd.xlane.f32.xlu0 %v580
    %v670 = vpop.xlane.xlu0 %669
    %671 = vadd.xlane.f32.xlu0 %v585
    %v672 = vpop.xlane.xlu0 %671
    %673 = vadd.xlane.f32.xlu0 %v590
    %v674 = vpop.xlane.xlu0 %673
    %675 = vadd.xlane.f32.xlu0 %v595
    %v676 = vpop.xlane.xlu0 %675
    %677 = vadd.xlane.f32.xlu0 %v600
    %v678 = vpop.xlane.xlu0 %677
    %679 = vadd.xlane.f32.xlu0 %v605
    %v680 = vpop.xlane.xlu0 %679
    %681 = vadd.xlane.f32.xlu0 %v610
    %v682 = vpop.xlane.xlu0 %681
    %683 = vadd.xlane.f32.xlu0 %v615
    %v684 = vpop.xlane.xlu0 %683
    %685 = vadd.xlane.f32.xlu0 %v620
    %v686 = vpop.xlane.xlu0 %685
    %v687 = vmul.f32 %v624, 0.03125
    %v688 = vmul.f32 %v626, 0.03125
    %v689 = vmul.f32 %v628, 0.03125
    %v690 = vmul.f32 %v630, 0.03125
    %v691 = vmul.f32 %v632, 0.03125
    %v692 = vmul.f32 %v634, 0.03125
    %v693 = vmul.f32 %v636, 0.03125
    %v694 = vmul.f32 %v638, 0.03125
    %v695 = vmul.f32 %v640, 0.03125
    %v696 = vmul.f32 %v642, 0.03125
    %v697 = vmul.f32 %v644, 0.03125
    %v698 = vmul.f32 %v646, 0.03125
    %v699 = vmul.f32 %v648, 0.03125
    %v700 = vmul.f32 %v650, 0.03125
    %v701 = vmul.f32 %v652, 0.03125
    %v702 = vmul.f32 %v654, 0.03125
    %v703 = vmul.f32 %v656, 0.03125
    %v704 = vmul.f32 %v658, 0.03125
    %v705 = vmul.f32 %v660, 0.03125
    %v706 = vmul.f32 %v662, 0.03125
    %v707 = vmul.f32 %v664, 0.03125
    %v708 = vmul.f32 %v666, 0.03125
    %v709 = vmul.f32 %v668, 0.03125
    %v710 = vmul.f32 %v670, 0.03125
    %v711 = vmul.f32 %v672, 0.03125
    %v712 = vmul.f32 %v674, 0.03125
    %v713 = vmul.f32 %v676, 0.03125
    %v714 = vmul.f32 %v678, 0.03125
    %v715 = vmul.f32 %v680, 0.03125
    %v716 = vmul.f32 %v682, 0.03125
    %v717 = vmul.f32 %v684, 0.03125
    %v718 = vmul.f32 %v686, 0.03125
    %v719 = vsub.f32 %v465, %v687
    %v720 = vsub.f32 %v470, %v688
    %v721 = vsub.f32 %v475, %v689
    %v722 = vsub.f32 %v480, %v690
    %v723 = vsub.f32 %v485, %v691
    %v724 = vsub.f32 %v490, %v692
    %v725 = vsub.f32 %v495, %v693
    %v726 = vsub.f32 %v500, %v694
    %v727 = vsub.f32 %v505, %v695
    %v728 = vsub.f32 %v510, %v696
    %v729 = vsub.f32 %v515, %v697
    %v730 = vsub.f32 %v520, %v698
    %v731 = vsub.f32 %v525, %v699
    %v732 = vsub.f32 %v530, %v700
    %v733 = vsub.f32 %v535, %v701
    %v734 = vsub.f32 %v540, %v702
    %v735 = vsub.f32 %v545, %v703
    %v736 = vsub.f32 %v550, %v704
    %v737 = vsub.f32 %v555, %v705
    %v738 = vsub.f32 %v560, %v706
    %v739 = vsub.f32 %v565, %v707
    %v740 = vsub.f32 %v570, %v708
    %v741 = vsub.f32 %v575, %v709
    %v742 = vsub.f32 %v580, %v710
    %v743 = vsub.f32 %v585, %v711
    %v744 = vsub.f32 %v590, %v712
    %v745 = vsub.f32 %v595, %v713
    %v746 = vsub.f32 %v600, %v714
    %v747 = vsub.f32 %v605, %v715
    %v748 = vsub.f32 %v610, %v716
    %v749 = vsub.f32 %v615, %v717
    %v750 = vsub.f32 %v620, %v718
    %v751 = vlaneseq
    %v752 = vand.u32 %v751, 127
    %vm753 = vcmp.lt.s32.totalorder %v752, 32
    %v754 = vsel %vm753, %v719, 0.0
    %v755 = vsel %vm753, %v720, 0.0
    %v756 = vsel %vm753, %v721, 0.0
    %v757 = vsel %vm753, %v722, 0.0
    %v758 = vsel %vm753, %v723, 0.0
    %v759 = vsel %vm753, %v724, 0.0
    %v760 = vsel %vm753, %v725, 0.0
    %v761 = vsel %vm753, %v726, 0.0
    %v762 = vsel %vm753, %v727, 0.0
    %v763 = vsel %vm753, %v728, 0.0
    %v764 = vsel %vm753, %v729, 0.0
    %v765 = vsel %vm753, %v730, 0.0
    %v766 = vsel %vm753, %v731, 0.0
    %v767 = vsel %vm753, %v732, 0.0
    %v768 = vsel %vm753, %v733, 0.0
    %v769 = vsel %vm753, %v734, 0.0
    %v770 = vsel %vm753, %v735, 0.0
    %v771 = vsel %vm753, %v736, 0.0
    %v772 = vsel %vm753, %v737, 0.0
    %v773 = vsel %vm753, %v738, 0.0
    %v774 = vsel %vm753, %v739, 0.0
    %v775 = vsel %vm753, %v740, 0.0
    %v776 = vsel %vm753, %v741, 0.0
    %v777 = vsel %vm753, %v742, 0.0
    %v778 = vsel %vm753, %v743, 0.0
    %v779 = vsel %vm753, %v744, 0.0
    %v780 = vsel %vm753, %v745, 0.0
    %v781 = vsel %vm753, %v746, 0.0
    %v782 = vsel %vm753, %v747, 0.0
    %v783 = vsel %vm753, %v748, 0.0
    %v784 = vsel %vm753, %v749, 0.0
    %v785 = vsel %vm753, %v750, 0.0
    %v786 = vmul.f32 %v754, %v754
    %v787 = vmul.f32 %v755, %v755
    %v788 = vmul.f32 %v756, %v756
    %v789 = vmul.f32 %v757, %v757
    %v790 = vmul.f32 %v758, %v758
    %v791 = vmul.f32 %v759, %v759
    %v792 = vmul.f32 %v760, %v760
    %v793 = vmul.f32 %v761, %v761
    %v794 = vmul.f32 %v762, %v762
    %v795 = vmul.f32 %v763, %v763
    %v796 = vmul.f32 %v764, %v764
    %v797 = vmul.f32 %v765, %v765
    %v798 = vmul.f32 %v766, %v766
    %v799 = vmul.f32 %v767, %v767
    %v800 = vmul.f32 %v768, %v768
    %v801 = vmul.f32 %v769, %v769
    %v802 = vmul.f32 %v770, %v770
    %v803 = vmul.f32 %v771, %v771
    %v804 = vmul.f32 %v772, %v772
    %v805 = vmul.f32 %v773, %v773
    %v806 = vmul.f32 %v774, %v774
    %v807 = vmul.f32 %v775, %v775
    %v808 = vmul.f32 %v776, %v776
    %v809 = vmul.f32 %v777, %v777
    %v810 = vmul.f32 %v778, %v778
    %v811 = vmul.f32 %v779, %v779
    %v812 = vmul.f32 %v780, %v780
    %v813 = vmul.f32 %v781, %v781
    %v814 = vmul.f32 %v782, %v782
    %v815 = vmul.f32 %v783, %v783
    %v816 = vmul.f32 %v784, %v784
    %v817 = vmul.f32 %v785, %v785
    %818 = vadd.xlane.f32.xlu0 %v786
    %v819 = vpop.xlane.xlu0 %818
    %820 = vadd.xlane.f32.xlu0 %v787
    %v821 = vpop.xlane.xlu0 %820
    %822 = vadd.xlane.f32.xlu0 %v788
    %v823 = vpop.xlane.xlu0 %822
    %824 = vadd.xlane.f32.xlu0 %v789
    %v825 = vpop.xlane.xlu0 %824
    %826 = vadd.xlane.f32.xlu0 %v790
    %v827 = vpop.xlane.xlu0 %826
    %828 = vadd.xlane.f32.xlu0 %v791
    %v829 = vpop.xlane.xlu0 %828
    %830 = vadd.xlane.f32.xlu0 %v792
    %v831 = vpop.xlane.xlu0 %830
    %832 = vadd.xlane.f32.xlu0 %v793
    %v833 = vpop.xlane.xlu0 %832
    %834 = vadd.xlane.f32.xlu0 %v794
    %v835 = vpop.xlane.xlu0 %834
    %836 = vadd.xlane.f32.xlu0 %v795
    %v837 = vpop.xlane.xlu0 %836
    %838 = vadd.xlane.f32.xlu0 %v796
    %v839 = vpop.xlane.xlu0 %838
    %840 = vadd.xlane.f32.xlu0 %v797
    %v841 = vpop.xlane.xlu0 %840
    %842 = vadd.xlane.f32.xlu0 %v798
    %v843 = vpop.xlane.xlu0 %842
    %844 = vadd.xlane.f32.xlu0 %v799
    %v845 = vpop.xlane.xlu0 %844
    %846 = vadd.xlane.f32.xlu0 %v800
    %v847 = vpop.xlane.xlu0 %846
    %848 = vadd.xlane.f32.xlu0 %v801
    %v849 = vpop.xlane.xlu0 %848
    %850 = vadd.xlane.f32.xlu0 %v802
    %v851 = vpop.xlane.xlu0 %850
    %852 = vadd.xlane.f32.xlu0 %v803
    %v853 = vpop.xlane.xlu0 %852
    %854 = vadd.xlane.f32.xlu0 %v804
    %v855 = vpop.xlane.xlu0 %854
    %856 = vadd.xlane.f32.xlu0 %v805
    %v857 = vpop.xlane.xlu0 %856
    %858 = vadd.xlane.f32.xlu0 %v806
    %v859 = vpop.xlane.xlu0 %858
    %860 = vadd.xlane.f32.xlu0 %v807
    %v861 = vpop.xlane.xlu0 %860
    %862 = vadd.xlane.f32.xlu0 %v808
    %v863 = vpop.xlane.xlu0 %862
    %864 = vadd.xlane.f32.xlu0 %v809
    %v865 = vpop.xlane.xlu0 %864
    %866 = vadd.xlane.f32.xlu0 %v810
    %v867 = vpop.xlane.xlu0 %866
    %868 = vadd.xlane.f32.xlu0 %v811
    %v869 = vpop.xlane.xlu0 %868
    %870 = vadd.xlane.f32.xlu0 %v812
    %v871 = vpop.xlane.xlu0 %870
    %872 = vadd.xlane.f32.xlu0 %v813
    %v873 = vpop.xlane.xlu0 %872
    %874 = vadd.xlane.f32.xlu0 %v814
    %v875 = vpop.xlane.xlu0 %874
    %876 = vadd.xlane.f32.xlu0 %v815
    %v877 = vpop.xlane.xlu0 %876
    %878 = vadd.xlane.f32.xlu0 %v816
    %v879 = vpop.xlane.xlu0 %878
    %880 = vadd.xlane.f32.xlu0 %v817
    %v881 = vpop.xlane.xlu0 %880
    %v882 = vmul.f32 %v819, 0.03125
    %v883 = vmul.f32 %v821, 0.03125
    %v884 = vmul.f32 %v823, 0.03125
    %v885 = vmul.f32 %v825, 0.03125
    %v886 = vmul.f32 %v827, 0.03125
    %v887 = vmul.f32 %v829, 0.03125
    %v888 = vmul.f32 %v831, 0.03125
    %v889 = vmul.f32 %v833, 0.03125
    %v890 = vmul.f32 %v835, 0.03125
    %v891 = vmul.f32 %v837, 0.03125
    %v892 = vmul.f32 %v839, 0.03125
    %v893 = vmul.f32 %v841, 0.03125
    %v894 = vmul.f32 %v843, 0.03125
    %v895 = vmul.f32 %v845, 0.03125
    %v896 = vmul.f32 %v847, 0.03125
    %v897 = vmul.f32 %v849, 0.03125
    %v898 = vmul.f32 %v851, 0.03125
    %v899 = vmul.f32 %v853, 0.03125
    %v900 = vmul.f32 %v855, 0.03125
    %v901 = vmul.f32 %v857, 0.03125
    %v902 = vmul.f32 %v859, 0.03125
    %v903 = vmul.f32 %v861, 0.03125
    %v904 = vmul.f32 %v863, 0.03125
    %v905 = vmul.f32 %v865, 0.03125
    %v906 = vmul.f32 %v867, 0.03125
    %v907 = vmul.f32 %v869, 0.03125
    %v908 = vmul.f32 %v871, 0.03125
    %v909 = vmul.f32 %v873, 0.03125
    %v910 = vmul.f32 %v875, 0.03125
    %v911 = vmul.f32 %v877, 0.03125
    %v912 = vmul.f32 %v879, 0.03125
    %v913 = vmul.f32 %v881, 0.03125
    %v914 = vadd.f32 %v882, 1e-05
    %v915 = vadd.f32 %v883, 1e-05
    %v916 = vadd.f32 %v884, 1e-05
    %v917 = vadd.f32 %v885, 1e-05
    %v918 = vadd.f32 %v886, 1e-05
    %v919 = vadd.f32 %v887, 1e-05
    %v920 = vadd.f32 %v888, 1e-05
    %v921 = vadd.f32 %v889, 1e-05
    %v922 = vadd.f32 %v890, 1e-05
    %v923 = vadd.f32 %v891, 1e-05
    %v924 = vadd.f32 %v892, 1e-05
    %v925 = vadd.f32 %v893, 1e-05
    %v926 = vadd.f32 %v894, 1e-05
    %v927 = vadd.f32 %v895, 1e-05
    %v928 = vadd.f32 %v896, 1e-05
    %v929 = vadd.f32 %v897, 1e-05
    %v930 = vadd.f32 %v898, 1e-05
    %v931 = vadd.f32 %v899, 1e-05
    %v932 = vadd.f32 %v900, 1e-05
    %v933 = vadd.f32 %v901, 1e-05
    %v934 = vadd.f32 %v902, 1e-05
    %v935 = vadd.f32 %v903, 1e-05
    %v936 = vadd.f32 %v904, 1e-05
    %v937 = vadd.f32 %v905, 1e-05
    %v938 = vadd.f32 %v906, 1e-05
    %v939 = vadd.f32 %v907, 1e-05
    %v940 = vadd.f32 %v908, 1e-05
    %v941 = vadd.f32 %v909, 1e-05
    %v942 = vadd.f32 %v910, 1e-05
    %v943 = vadd.f32 %v911, 1e-05
    %v944 = vadd.f32 %v912, 1e-05
    %v945 = vadd.f32 %v913, 1e-05
    %v946 = vrsqrt.pop %v914
    %v947 = vrsqrt.pop %v915
    %v948 = vrsqrt.pop %v916
    %v949 = vrsqrt.pop %v917
    %v950 = vrsqrt.pop %v918
    %v951 = vrsqrt.pop %v919
    %v952 = vrsqrt.pop %v920
    %v953 = vrsqrt.pop %v921
    %v954 = vrsqrt.pop %v922
    %v955 = vrsqrt.pop %v923
    %v956 = vrsqrt.pop %v924
    %v957 = vrsqrt.pop %v925
    %v958 = vrsqrt.pop %v926
    %v959 = vrsqrt.pop %v927
    %v960 = vrsqrt.pop %v928
    %v961 = vrsqrt.pop %v929
    %v962 = vrsqrt.pop %v930
    %v963 = vrsqrt.pop %v931
    %v964 = vrsqrt.pop %v932
    %v965 = vrsqrt.pop %v933
    %v966 = vrsqrt.pop %v934
    %v967 = vrsqrt.pop %v935
    %v968 = vrsqrt.pop %v936
    %v969 = vrsqrt.pop %v937
    %v970 = vrsqrt.pop %v938
    %v971 = vrsqrt.pop %v939
    %v972 = vrsqrt.pop %v940
    %v973 = vrsqrt.pop %v941
    %v974 = vrsqrt.pop %v942
    %v975 = vrsqrt.pop %v943
    %v976 = vrsqrt.pop %v944
    %v977 = vrsqrt.pop %v945
    %v978 = vmul.f32 %v754, %v946
    %v979 = vmul.f32 %v755, %v947
    %v980 = vmul.f32 %v756, %v948
    %v981 = vmul.f32 %v757, %v949
    %v982 = vmul.f32 %v758, %v950
    %v983 = vmul.f32 %v759, %v951
    %v984 = vmul.f32 %v760, %v952
    %v985 = vmul.f32 %v761, %v953
    %v986 = vmul.f32 %v762, %v954
    %v987 = vmul.f32 %v763, %v955
    %v988 = vmul.f32 %v764, %v956
    %v989 = vmul.f32 %v765, %v957
    %v990 = vmul.f32 %v766, %v958
    %v991 = vmul.f32 %v767, %v959
    %v992 = vmul.f32 %v768, %v960
    %v993 = vmul.f32 %v769, %v961
    %v994 = vmul.f32 %v770, %v962
    %v995 = vmul.f32 %v771, %v963
    %v996 = vmul.f32 %v772, %v964
    %v997 = vmul.f32 %v773, %v965
    %v998 = vmul.f32 %v774, %v966
    %v999 = vmul.f32 %v775, %v967
    %v1000 = vmul.f32 %v776, %v968
    %v1001 = vmul.f32 %v777, %v969
    %v1002 = vmul.f32 %v778, %v970
    %v1003 = vmul.f32 %v779, %v971
    %v1004 = vmul.f32 %v780, %v972
    %v1005 = vmul.f32 %v781, %v973
    %v1006 = vmul.f32 %v782, %v974
    %v1007 = vmul.f32 %v783, %v975
    %v1008 = vmul.f32 %v784, %v976
    %v1009 = vmul.f32 %v785, %v977
    %v1010 = vld [vmem:[%s5] sm:$0x1]
    %v1012 = vlaneseq
    %v1013 = vshrl.u32 %v1012, 7
    %v1014 = vsub.s32 0, %v1013
    %v1015 = vrot.slane %v1010, %v1014
    %v1017 = vmul.f32 %v978, %v1015
    %v1018 = vmul.f32 %v979, %v1015
    %v1019 = vmul.f32 %v980, %v1015
    %v1020 = vmul.f32 %v981, %v1015
    %v1021 = vmul.f32 %v982, %v1015
    %v1022 = vmul.f32 %v983, %v1015
    %v1023 = vmul.f32 %v984, %v1015
    %v1024 = vmul.f32 %v985, %v1015
    %v1025 = vmul.f32 %v986, %v1015
    %v1026 = vmul.f32 %v987, %v1015
    %v1027 = vmul.f32 %v988, %v1015
    %v1028 = vmul.f32 %v989, %v1015
    %v1029 = vmul.f32 %v990, %v1015
    %v1030 = vmul.f32 %v991, %v1015
    %v1031 = vmul.f32 %v992, %v1015
    %v1032 = vmul.f32 %v993, %v1015
    %v1033 = vmul.f32 %v994, %v1015
    %v1034 = vmul.f32 %v995, %v1015
    %v1035 = vmul.f32 %v996, %v1015
    %v1036 = vmul.f32 %v997, %v1015
    %v1037 = vmul.f32 %v998, %v1015
    %v1038 = vmul.f32 %v999, %v1015
    %v1039 = vmul.f32 %v1000, %v1015
    %v1040 = vmul.f32 %v1001, %v1015
    %v1041 = vmul.f32 %v1002, %v1015
    %v1042 = vmul.f32 %v1003, %v1015
    %v1043 = vmul.f32 %v1004, %v1015
    %v1044 = vmul.f32 %v1005, %v1015
    %v1045 = vmul.f32 %v1006, %v1015
    %v1046 = vmul.f32 %v1007, %v1015
    %v1047 = vmul.f32 %v1008, %v1015
    %v1048 = vmul.f32 %v1009, %v1015
    %v1049 = vld [vmem:[%s6] sm:$0x1]
    %v1051 = vlaneseq
    %v1052 = vshrl.u32 %v1051, 7
    %v1053 = vsub.s32 0, %v1052
    %v1054 = vrot.slane %v1049, %v1053
    %v1056 = vadd.f32 %v1017, %v1054
    %v1057 = vadd.f32 %v1018, %v1054
    %v1058 = vadd.f32 %v1019, %v1054
    %v1059 = vadd.f32 %v1020, %v1054
    %v1060 = vadd.f32 %v1021, %v1054
    %v1061 = vadd.f32 %v1022, %v1054
    %v1062 = vadd.f32 %v1023, %v1054
    %v1063 = vadd.f32 %v1024, %v1054
    %v1064 = vadd.f32 %v1025, %v1054
    %v1065 = vadd.f32 %v1026, %v1054
    %v1066 = vadd.f32 %v1027, %v1054
    %v1067 = vadd.f32 %v1028, %v1054
    %v1068 = vadd.f32 %v1029, %v1054
    %v1069 = vadd.f32 %v1030, %v1054
    %v1070 = vadd.f32 %v1031, %v1054
    %v1071 = vadd.f32 %v1032, %v1054
    %v1072 = vadd.f32 %v1033, %v1054
    %v1073 = vadd.f32 %v1034, %v1054
    %v1074 = vadd.f32 %v1035, %v1054
    %v1075 = vadd.f32 %v1036, %v1054
    %v1076 = vadd.f32 %v1037, %v1054
    %v1077 = vadd.f32 %v1038, %v1054
    %v1078 = vadd.f32 %v1039, %v1054
    %v1079 = vadd.f32 %v1040, %v1054
    %v1080 = vadd.f32 %v1041, %v1054
    %v1081 = vadd.f32 %v1042, %v1054
    %v1082 = vadd.f32 %v1043, %v1054
    %v1083 = vadd.f32 %v1044, %v1054
    %v1084 = vadd.f32 %v1045, %v1054
    %v1085 = vadd.f32 %v1046, %v1054
    %v1086 = vadd.f32 %v1047, %v1054
    %v1087 = vadd.f32 %v1048, %v1054
    %1088 = vst [vmem:[#allocation5] sm:$0xff] %v1056
    %1089 = vst [vmem:[#allocation5 + $0x8] sm:$0xff] %v1057
    %1090 = vst [vmem:[#allocation5 + $0x10] sm:$0xff] %v1058
    %1091 = vst [vmem:[#allocation5 + $0x18] sm:$0xff] %v1059
    %1092 = vst [vmem:[#allocation5 + $0x20] sm:$0xff] %v1060
    %1093 = vst [vmem:[#allocation5 + $0x28] sm:$0xff] %v1061
    %1094 = vst [vmem:[#allocation5 + $0x30] sm:$0xff] %v1062
    %1095 = vst [vmem:[#allocation5 + $0x38] sm:$0xff] %v1063
    %1096 = vst [vmem:[#allocation5 + $0x40] sm:$0xff] %v1064
    %1097 = vst [vmem:[#allocation5 + $0x48] sm:$0xff] %v1065
    %1098 = vst [vmem:[#allocation5 + $0x50] sm:$0xff] %v1066
    %1099 = vst [vmem:[#allocation5 + $0x58] sm:$0xff] %v1067
    %1100 = vst [vmem:[#allocation5 + $0x60] sm:$0xff] %v1068
    %1101 = vst [vmem:[#allocation5 + $0x68] sm:$0xff] %v1069
    %1102 = vst [vmem:[#allocation5 + $0x70] sm:$0xff] %v1070
    %1103 = vst [vmem:[#allocation5 + $0x78] sm:$0xff] %v1071
    %1104 = vst [vmem:[#allocation5 + $0x80] sm:$0xff] %v1072
    %1105 = vst [vmem:[#allocation5 + $0x88] sm:$0xff] %v1073
    %1106 = vst [vmem:[#allocation5 + $0x90] sm:$0xff] %v1074
    %1107 = vst [vmem:[#allocation5 + $0x98] sm:$0xff] %v1075
    %1108 = vst [vmem:[#allocation5 + $0xa0] sm:$0xff] %v1076
    %1109 = vst [vmem:[#allocation5 + $0xa8] sm:$0xff] %v1077
    %1110 = vst [vmem:[#allocation5 + $0xb0] sm:$0xff] %v1078
    %1111 = vst [vmem:[#allocation5 + $0xb8] sm:$0xff] %v1079
    %1112 = vst [vmem:[#allocation5 + $0xc0] sm:$0xff] %v1080
    %1113 = vst [vmem:[#allocation5 + $0xc8] sm:$0xff] %v1081
    %1114 = vst [vmem:[#allocation5 + $0xd0] sm:$0xff] %v1082
    %1115 = vst [vmem:[#allocation5 + $0xd8] sm:$0xff] %v1083
    %1116 = vst [vmem:[#allocation5 + $0xe0] sm:$0xff] %v1084
    %1117 = vst [vmem:[#allocation5 + $0xe8] sm:$0xff] %v1085
    %1118 = vst [vmem:[#allocation5 + $0xf0] sm:$0xff] %v1086
    %1119 = vst [vmem:[#allocation5 + $0xf8] sm:$0xff] %v1087
    // Predicated region
    $region34: #{tpu_custom_call.1} parent=1 // pred_check
      _
    $region35: #{tpu_custom_call.1} parent=1 // pred_check_branch
      %1121 = sbr.rel (0) target = $region37
    $region36: #{tpu_custom_call.1} parent=1 // pred_region
      %s1123 = ssub.s32 4096, 256
      %1124 = vsyncadd [#allocation4], %s1123
      %s1125 = sshll.u32 [#allocation5], 4
      %s1126 = int_to_ptr.vmem [resolvable:$true] %s1125
      %1131 = dma.vmem_to_hbm [thread:$0]  %s1126, 256, %s7, [#allocation4], 128, 128, 8
    $region37: #{tpu_custom_call.1} parent=1 // pred_fallthru
      _
    // Predicated region
    $region38: #{tpu_custom_call.1} parent=1 // pred_check
      _
    $region39: #{tpu_custom_call.1} parent=1 // pred_check_branch
      %1133 = sbr.rel (0) target = $region41
    $region40: #{tpu_custom_call.1} parent=1 // pred_region
      %1134 = dma.done [#allocation4], 4096
    $region41: #{tpu_custom_call.1} parent=1 // pred_fallthru
      _
    %1135 = vsyncpa [#allocation3], 1
    %1136 = vsyncpa [#allocation4], 1

</llo_original>
